<compile_context>
chip_gen: v6e
topology: v6e:2x2x1
jax: 0.10.0
libtpu: 0.0.40
codegen_flags: <defaults>
</compile_context>

<pallas_src>
import functools
import math

import jax
import jax.numpy as jnp
from jax.experimental import pallas as pl
from jax.experimental.pallas import tpu as pltpu

BN_EPS = 1e-3
LANE = 128   # internal channel padding granularity (lane-dense stores on all gens)


# ----------------------------------------------------------------------------- helpers
def _round_up(x, m):
    return ((x + m - 1) // m) * m


try:
    _VMEM_CAP = int(pltpu.get_tpu_info().vmem_capacity_bytes)
except Exception:
    _VMEM_CAP = 64 << 20

# ~3/4 of physical VMEM, capped at 96 MiB (96 MiB on v5e/v6e, 48 MiB on v7x).
_VMEM_LIMIT = max(32 << 20, min((_VMEM_CAP * 3) // 4, 96 << 20))
# depthwise halo-tile DMA budget: generation aware (bigger tiles on 128-MiB-VMEM chips).
_DW_TILE_BUDGET = (24 << 20) if _VMEM_CAP >= (100 << 20) else (10 << 20)


def _cp(c):
    return _round_up(c, LANE)


def _choose_row_tile(m):
    """Row (M) tile that divides m when possible (avoids a pad copy)."""
    if m <= 512:
        return m
    for t in (512, 256, 128, 64, 32, 16, 8):
        if m % t == 0:
            return t
    return 512   # rare fallback -> caller pads


def _choose_tn(n):
    """Lane (N) tile: keep the 256-wide MXUs of v6e/v7x fed (384 for 768/1152)."""
    if n <= 512:
        return n
    for t in (512, 384, 256, 128):
        if n % t == 0:
            return t
    return 128


def _same_pad(h, w, k, s):
    """TF-style SAME padding (efficientnet_pytorch Conv2dSamePadding)."""
    oh = -(-h // s)
    ow = -(-w // s)
    ph = max((oh - 1) * s + k - h, 0)
    pw = max((ow - 1) * s + k - w, 0)
    return (ph // 2, ph - ph // 2), (pw // 2, pw - pw // 2), oh, ow


def _choose_toh(oh, ow, k, s, c):
    """Output-row tile for the depthwise halo kernel, bounded by the DMA-buffer budget."""
    hh = (k - 1) // s
    pw = ow + hh
    per_row = (s * s) * pw * c * 2     # bf16 bytes of input per output row
    cap = max(8, _DW_TILE_BUDGET // per_row - hh)
    if oh <= cap:
        return oh, 1
    toh = max(8, (cap // 8) * 8)
    return toh, -(-oh // toh)


# ----------------------------------------------------------------------------- kernels
def _mm_bias_act_kernel(x_ref, w_ref, b_ref, o_ref, *, act):
    y = jnp.dot(x_ref[...], w_ref[...], preferred_element_type=jnp.float32)
    y = y + b_ref[...]
    if act == "swish":
        y = y * jax.nn.sigmoid(y)
    o_ref[...] = y.astype(o_ref.dtype)


def _dw_halo_kernel(xph_hbm, w_ref, b_ref, o_ref, pool_ref, xbuf, sem, *,
                    k, s, toh, oh, ow, hh, inv_hw, mask):
    """Depthwise kxk conv (folded BN) + swish on one spatial row-tile.

    xph_hbm: (B*s*s, PH, PW, C) phase-decomposed SAME-padded input, left in HBM.
    Each grid step DMAs only the (s*s, toh+hh, PW, C) slab it needs (halo rows incl.),
    forms the k*k taps with shifted in-VMEM slices, and emits a per-tile partial pool.
    """
    b = pl.program_id(0)
    i = pl.program_id(1)
    p_cnt = s * s

    cp = pltpu.make_async_copy(
        xph_hbm.at[pl.ds(b * p_cnt, p_cnt), pl.ds(i * toh, toh + hh), :, :],
        xbuf, sem.at[0])
    cp.start()
    cp.wait()

    acc = None
    for kh in range(k):
        for kw in range(k):
            ph = (kh % s) * s + (kw % s)
            win = xbuf[ph, kh // s: kh // s + toh, kw // s: kw // s + ow, :]
            term = win.astype(jnp.float32) * w_ref[kh * k + kw]
            acc = term if acc is None else acc + term

    y = acc + b_ref[...]
    y = y * jax.nn.sigmoid(y)
    o_ref[...] = y[None].astype(o_ref.dtype)

    if mask:  # zero rows beyond oh so the fused pooled mean stays exact
        rows = jax.lax.broadcasted_iota(jnp.int32, (toh, 1, 1), 0) + i * toh
        y = jnp.where(rows < oh, y, 0.0)
    psum = jnp.sum(y, axis=(0, 1)) * inv_hw
    pool_ref[...] = psum.reshape(1, 1, 1, y.shape[-1])


def _proj_kernel(x_ref, g_ref, w_ref, b_ref, o_ref):
    xg = x_ref[0] * g_ref[0]                       # bf16 SE gating (gate pre-sigmoided)
    y = jnp.dot(xg, w_ref[...], preferred_element_type=jnp.float32) + b_ref[...]
    o_ref[...] = y[None].astype(o_ref.dtype)


def _proj_res_kernel(x_ref, g_ref, w_ref, b_ref, r_ref, o_ref):
    xg = x_ref[0] * g_ref[0]
    y = jnp.dot(xg, w_ref[...], preferred_element_type=jnp.float32)
    y = y + b_ref[...] + r_ref[0].astype(jnp.float32)
    o_ref[...] = y[None].astype(o_ref.dtype)


# ----------------------------------------------------------------------------- wrappers
def matmul_bias_act(x, w, bias, act="none"):
    """act(x @ w + bias). x:(M,K) bf16, w:(K,N) bf16, bias:(N,) f32 -> (M,N) bf16."""
    M, K = x.shape
    N = w.shape[1]
    TM = _choose_row_tile(M)
    TN = _choose_tn(N)
    Mp = _round_up(M, TM)
    if Mp > M:
        x = jnp.pad(x, ((0, Mp - M), (0, 0)))
    out = pl.pallas_call(
        functools.partial(_mm_bias_act_kernel, act=act),
        out_shape=jax.ShapeDtypeStruct((Mp, N), jnp.bfloat16),
        grid=(Mp // TM, N // TN),
        in_specs=[
            pl.BlockSpec((TM, K), lambda i, j: (i, 0)),
            pl.BlockSpec((K, TN), lambda i, j: (0, j)),
            pl.BlockSpec((1, TN), lambda i, j: (0, j)),
        ],
        out_specs=pl.BlockSpec((TM, TN), lambda i, j: (i, j)),
        compiler_params=pltpu.CompilerParams(
            dimension_semantics=("parallel", "parallel"),
            vmem_limit_bytes=_VMEM_LIMIT),
    )(x, w, bias.reshape(1, N))
    return out[:M] if Mp > M else out


def build_dw_phases(x, k, s, toh, n_tiles):
    """Phase-decompose the SAME-padded input so strided taps become plain slices.

    x: (B, H, W, C) bf16  ->  (B*s*s, PH, PW, C) bf16 kept in HBM for the halo kernel.
    phase p = u*s+v holds padded[s*r+u, s*c+v]; tap (kh,kw) of output (r,c) reads
    phase ((kh%s)*s + kw%s) at (r + kh//s, c + kw//s).
    """
    B, H, W, C = x.shape
    (pt, _pb), (pw0, _pw1), oh, ow = _same_pad(H, W, k, s)
    hh = (k - 1) // s
    PH = n_tiles * toh + hh
    PW = ow + hh
    xp = jnp.pad(x, ((0, 0), (pt, s * PH - H - pt), (pw0, s * PW - W - pw0), (0, 0)))
    xp = xp.reshape(B, PH, s, PW, s, C)
    xp = jnp.transpose(xp, (0, 2, 4, 1, 3, 5)).reshape(B * s * s, PH, PW, C)
    return xp.astype(jnp.bfloat16)


def dwconv_swish_pool(xph, w, bias, *, batch, k, s, toh, n_tiles, oh, ow, mask):
    """Depthwise conv + folded-BN bias + swish, fused per-tile global-average-pool.

    xph: (B*s*s, PH, PW, C) bf16 (HBM), w: (k*k, 1, C) f32, bias: (C,) f32.
    Returns (act (B, n_tiles*toh*ow, C) bf16, pooled mean (B, C) f32).
    """
    C = xph.shape[-1]
    hh = (k - 1) // s
    PW = ow + hh
    P = s * s
    kern = functools.partial(_dw_halo_kernel, k=k, s=s, toh=toh, oh=oh, ow=ow,
                             hh=hh, inv_hw=1.0 / float(oh * ow), mask=mask)
    act, pool = pl.pallas_call(
        kern,
        out_shape=(jax.ShapeDtypeStruct((batch, n_tiles * toh, ow, C), jnp.bfloat16),
                   jax.ShapeDtypeStruct((batch, n_tiles, 1, C), jnp.float32)),
        grid=(batch, n_tiles),
        in_specs=[
            pl.BlockSpec(memory_space=pl.ANY),                 # input stays in HBM
            pl.BlockSpec((k * k, 1, C), lambda b, i: (0, 0, 0)),
            pl.BlockSpec((1, C), lambda b, i: (0, 0)),
        ],
        out_specs=(pl.BlockSpec((1, toh, ow, C), lambda b, i: (b, i, 0, 0)),
                   pl.BlockSpec((1, 1, 1, C), lambda b, i: (b, i, 0, 0))),
        scratch_shapes=[pltpu.VMEM((P, toh + hh, PW, C), jnp.bfloat16),
                        pltpu.SemaphoreType.DMA((1,))],
        compiler_params=pltpu.CompilerParams(
            dimension_semantics=("parallel", "parallel"),
            vmem_limit_bytes=_VMEM_LIMIT),
    )(xph, w, bias.reshape(1, C))
    pooled = jnp.sum(pool, axis=(1, 2))                         # (B, C) exact mean
    return act.reshape(batch, n_tiles * toh * ow, C), pooled


def project_se(x_act, gate_sig, w, bias, residual=None):
    """(x * gate_sig) @ w + bias [+ residual], gate_sig pre-sigmoided bf16.

    x_act: (B, M, K) bf16, gate_sig: (B, 1, K) bf16, w: (K, N) bf16, bias: (N,) f32,
    residual: (B, M, N) bf16 or None  ->  (B, M, N) bf16.
    """
    B, M, K = x_act.shape
    N = w.shape[1]
    TN = _choose_tn(N)
    TM = _choose_row_tile(M)           # decoupled from the depthwise tile
    Mp = _round_up(M, TM)
    if Mp > M:
        x_act = jnp.pad(x_act, ((0, 0), (0, Mp - M), (0, 0)))
        if residual is not None:
            residual = jnp.pad(residual, ((0, 0), (0, Mp - M), (0, 0)))
    args = [x_act, gate_sig, w, bias.reshape(1, N)]
    in_specs = [
        pl.BlockSpec((1, TM, K), lambda b, i, j: (b, i, 0)),
        pl.BlockSpec((1, 1, K), lambda b, i, j: (b, 0, 0)),
        pl.BlockSpec((K, TN), lambda b, i, j: (0, j)),
        pl.BlockSpec((1, TN), lambda b, i, j: (0, j)),
    ]
    if residual is not None:
        args.append(residual)
        in_specs.append(pl.BlockSpec((1, TM, TN), lambda b, i, j: (b, i, j)))
        kernel = _proj_res_kernel
    else:
        kernel = _proj_kernel
    out = pl.pallas_call(
        kernel,
        out_shape=jax.ShapeDtypeStruct((B, Mp, N), jnp.bfloat16),
        grid=(B, Mp // TM, N // TN),
        in_specs=in_specs,
        out_specs=pl.BlockSpec((1, TM, TN), lambda b, i, j: (b, i, j)),
        compiler_params=pltpu.CompilerParams(
            dimension_semantics=("parallel", "parallel", "parallel"),
            vmem_limit_bytes=_VMEM_LIMIT),
    )(*args)
    return out[:, :M] if Mp > M else out


# ----------------------------------------------------------------------------- stem glue
def extract_im2col(x, k, s, k_pad):
    """x:(B,H,W,C) f32 -> ((B*oh*ow, k_pad) bf16, oh, ow) with TF-SAME padding."""
    B, H, W, C = x.shape
    (pt, pb), (pw0, pw1), oh, ow = _same_pad(H, W, k, s)
    xp = jnp.pad(x, ((0, 0), (pt, pb), (pw0, pw1), (0, 0)))
    taps = [xp[:, kh:kh + s * oh:s, kw:kw + s * ow:s, :] for kh in range(k) for kw in range(k)]
    p = jnp.stack(taps, axis=3).reshape(B * oh * ow, k * k * C)
    p = jnp.pad(p, ((0, 0), (0, k_pad - k * k * C)))
    return p.astype(jnp.bfloat16), oh, ow


# ----------------------------------------------------------------------------- model cfg
# EfficientNet-B0 MBConv stack: (kernel, stride, c_in, c_out, expand_ratio)
BLOCK_CFGS = []


def _add(reps, k, s, cin, cout, e):
    for r in range(reps):
        BLOCK_CFGS.append((k, s if r == 0 else 1, cin if r == 0 else cout, cout, e))


_add(1, 3, 1, 32, 16, 1)
_add(2, 3, 2, 16, 24, 6)
_add(2, 5, 2, 24, 40, 6)
_add(3, 3, 2, 40, 80, 6)
_add(3, 5, 1, 80, 112, 6)
_add(4, 5, 2, 112, 192, 6)
_add(1, 3, 1, 192, 320, 6)
STEM_CH = 32


# ----------------------------------------------------------------------------- params
def _bn_fold(c):
    # eval-mode BN with default statistics: gamma=1, beta=0, mean=0, var=1
    gamma = jnp.ones((c,), jnp.float32)
    beta = jnp.zeros((c,), jnp.float32)
    mean = jnp.zeros((c,), jnp.float32)
    var = jnp.ones((c,), jnp.float32)
    scale = gamma / jnp.sqrt(var + BN_EPS)
    bias = beta - mean * scale
    return scale, bias


def _pad2(w, rows, cols):
    return jnp.pad(w, ((0, rows - w.shape[0]), (0, cols - w.shape[1])))


def build_params(key):
    counter = [0]

    def rand(shape, fan_in):
        counter[0] += 1
        kk = jax.random.fold_in(key, counter[0])
        return jax.random.normal(kk, shape, jnp.float32) / math.sqrt(fan_in)

    params = {"blocks": []}

    # stem 3x3/s2 conv: BN folded into weights, K (=27) and cout padded to 128.
    stem_w = rand((3 * 3 * 3, STEM_CH), 3 * 3 * 3)
    ss, sb = _bn_fold(STEM_CH)
    params["stem_w"] = _pad2(stem_w * ss[None, :], _round_up(27, LANE), _cp(STEM_CH)).astype(jnp.bfloat16)
    params["stem_b"] = jnp.pad(sb, (0, _cp(STEM_CH) - STEM_CH))

    for (k, _s, cin, cout, e) in BLOCK_CFGS:
        cexp = cin * e
        cse = max(1, int(cin * 0.25))
        cinp, cexpp, coutp = _cp(cin), _cp(cexp), _cp(cout)
        bp = {}
        if e != 1:
            w0 = rand((cin, cexp), cin)
            s0, b0 = _bn_fold(cexp)
            bp["expand_w"] = _pad2(w0 * s0[None, :], cinp, cexpp).astype(jnp.bfloat16)
            bp["expand_b"] = jnp.pad(b0, (0, cexpp - cexp))
        dw = rand((k * k, cexp), k * k)
        s1, b1 = _bn_fold(cexp)
        bp["dw_w"] = jnp.pad(dw * s1[None, :], ((0, 0), (0, cexpp - cexp))).reshape(k * k, 1, cexpp).astype(jnp.float32)
        bp["dw_b"] = jnp.pad(b1, (0, cexpp - cexp))
        bp["se_rw"] = _pad2(rand((cexp, cse), cexp), cexpp, cse)
        bp["se_rb"] = jnp.zeros((cse,), jnp.float32)
        bp["se_ew"] = _pad2(rand((cse, cexp), cse), cse, cexpp)
        bp["se_eb"] = jnp.zeros((cexpp,), jnp.float32)
        w2 = rand((cexp, cout), cexp)
        s2, b2 = _bn_fold(cout)
        bp["proj_w"] = _pad2(w2 * s2[None, :], cexpp, coutp).astype(jnp.bfloat16)
        bp["proj_b"] = jnp.pad(b2, (0, coutp - cout))
        params["blocks"].append(bp)
    return params


# ----------------------------------------------------------------------------- forward
def mbconv_block(x_bhwc, bp, k, stride, cin, cout, expand):
    B, H, W, cinp = x_bhwc.shape
    cexpp = _cp(cin * expand)
    coutp = _cp(cout)

    # expand: 1x1 conv (folded BN) + swish
    if expand != 1:
        x = matmul_bias_act(x_bhwc.reshape(B * H * W, cinp), bp["expand_w"], bp["expand_b"], act="swish")
        x = x.reshape(B, H, W, cexpp)
    else:
        x = x_bhwc

    # depthwise kxk conv (folded BN) + swish with fused per-tile global-average pool
    _, _, oh, ow = _same_pad(H, W, k, stride)
    toh, n_tiles = _choose_toh(oh, ow, k, stride, cexpp)
    mask = (n_tiles * toh != oh)
    xph = build_dw_phases(x, k, stride, toh, n_tiles)
    act, pooled = dwconv_swish_pool(xph, bp["dw_w"], bp["dw_b"], batch=B, k=k, s=stride,
                                    toh=toh, n_tiles=n_tiles, oh=oh, ow=ow, mask=mask)

    # squeeze & excitation: tiny FCs on the pooled (B, C) vector in f32 (plain JAX),
    # sigmoid applied here so the projection kernel only multiplies (bf16).
    g = pooled @ bp["se_rw"] + bp["se_rb"]
    g = g * jax.nn.sigmoid(g)
    gate = jax.nn.sigmoid(g @ bp["se_ew"] + bp["se_eb"]).reshape(B, 1, cexpp).astype(jnp.bfloat16)

    # project: SE gating fused into the 1x1 projection matmul (+ identity skip).
    # drop_connect is identity in eval mode.
    residual = None
    if stride == 1 and cin == cout:
        residual = x_bhwc.reshape(B, H * W, cinp)
        m_act = act.shape[1]
        if m_act > H * W:
            residual = jnp.pad(residual, ((0, 0), (0, m_act - H * W), (0, 0)))
    y = project_se(act, gate, bp["proj_w"], bp["proj_b"], residual=residual)
    hw = oh * ow
    return y[:, :hw, :].reshape(B, oh, ow, coutp)


def efficientnet_backbone(x_nchw, params):
    """Returns [P1..P5] in NCHW, matching _EfficientNet.forward (eval mode)."""
    x = jnp.transpose(x_nchw, (0, 2, 3, 1)).astype(jnp.float32)  # NCHW -> NHWC
    B = x.shape[0]

    # stem: 3x3 stride-2 SAME conv + folded BN + swish (im2col -> Pallas matmul)
    patches, oh, ow = extract_im2col(x, 3, 2, params["stem_w"].shape[0])
    x = matmul_bias_act(patches, params["stem_w"], params["stem_b"], act="swish")
    x = x.reshape(B, oh, ow, _cp(STEM_CH))

    feats = []
    last = None
    n = len(BLOCK_CFGS)
    for i, ((k, stride, cin, cout, e), bp) in enumerate(zip(BLOCK_CFGS, params["blocks"])):
        # TODO(synk): drop_connect stochastic path (training mode) not implemented; identity in eval.
        xnew = mbconv_block(x, bp, k, stride, cin, cout, e)
        if stride == 2:
            feats.append(last)
        elif i == n - 1:
            feats.append((xnew, cout))
        last = (xnew, cout)
        x = xnew

    # slice off the internal channel padding and return NCHW f32
    return [jnp.transpose(f[..., :c].astype(jnp.float32), (0, 3, 1, 2)) for (f, c) in feats]


# ----------------------------------------------------------------------------- main
if __name__ == "__main__":
    key = jax.random.PRNGKey(0)
    x = jax.random.normal(jax.random.fold_in(key, 12345), (2, 3, 64, 64), jnp.float32)
    params = build_params(key)

    feats = efficientnet_backbone(x, params)
    feats = jax.block_until_ready(feats)

    expected = [(2, 16, 32, 32), (2, 24, 16, 16), (2, 40, 8, 8), (2, 112, 4, 4), (2, 320, 2, 2)]
    got = [tuple(int(d) for d in f.shape) for f in feats]
    assert got == expected, f"shape mismatch: {got} vs {expected}"
    assert all(bool(jnp.all(jnp.isfinite(f))) for f in feats), "non-finite output"
    print("KERNEL_OK")
</pallas_src>

<mosaic_0001>
module attributes {stable_mosaic.version = 11 : i64} {
  func.func @_mm_bias_act_kernel(%arg0: i32, %arg1: i32, %arg2: memref<512x128xbf16, #tpu.memory_space<vmem>>, %arg3: memref<128x128xbf16, #tpu.memory_space<vmem>>, %arg4: memref<1x128xf32, #tpu.memory_space<vmem>>, %arg5: memref<512x128xbf16, #tpu.memory_space<vmem>>) attributes {dimension_semantics = [#tpu.dimension_semantics<parallel>, #tpu.dimension_semantics<parallel>], iteration_bounds = array<i64: 4, 1>, scalar_prefetch = 0 : i64, scratch_operands = 0 : i64, tpu.core_type = #tpu.core_type<tc>, window_params = [{transform_indices = @transform_0, window_bounds = array<i64: 512, 128>}, {transform_indices = @transform_1, window_bounds = array<i64: 128, 128>}, {transform_indices = @transform_2, window_bounds = array<i64: 1, 128>}, {transform_indices = @transform_3, window_bounds = array<i64: 512, 128>}]} {
    %c0 = arith.constant 0 : index
    %c0_0 = arith.constant 0 : index
    %0 = vector.load %arg2[%c0, %c0_0] : memref<512x128xbf16, #tpu.memory_space<vmem>>, vector<512x128xbf16>
    %c0_1 = arith.constant 0 : index
    %c0_2 = arith.constant 0 : index
    %1 = vector.load %arg3[%c0_1, %c0_2] : memref<128x128xbf16, #tpu.memory_space<vmem>>, vector<128x128xbf16>
    %cst = arith.constant dense<0.000000e+00> : vector<512x128xf32>
    %2 = tpu.matmul %0, %1, %cst {dimension_numbers = #tpu.dot_dimension_numbers<[1], [0], [0], [1], [0, 0, 1, 1], [], []>} : vector<512x128xbf16>, vector<128x128xbf16>, vector<512x128xf32> -> vector<512x128xf32>
    %c0_3 = arith.constant 0 : index
    %c0_4 = arith.constant 0 : index
    %3 = vector.load %arg4[%c0_3, %c0_4] : memref<1x128xf32, #tpu.memory_space<vmem>>, vector<1x128xf32>
    %4 = vector.broadcast %3 : vector<1x128xf32> to vector<512x128xf32>
    %5 = arith.addf %2, %4 : vector<512x128xf32>
    %6 = arith.negf %5 : vector<512x128xf32>
    %7 = math.exp %6 : vector<512x128xf32>
    %cst_5 = arith.constant 1.000000e+00 : f32
    %8 = vector.broadcast %cst_5 : f32 to vector<512x128xf32>
    %9 = arith.addf %8, %7 : vector<512x128xf32>
    %10 = arith.divf %8, %9 : vector<512x128xf32>
    %11 = arith.mulf %5, %10 : vector<512x128xf32>
    %12 = arith.truncf %11 : vector<512x128xf32> to vector<512x128xbf16>
    %c0_6 = arith.constant 0 : index
    %c0_7 = arith.constant 0 : index
    %13 = vector.load %arg5[%c0_6, %c0_7] : memref<512x128xbf16, #tpu.memory_space<vmem>>, vector<512x128xbf16>
    tpu.vector_store %arg5[%c0_6, %c0_7], %12 {strides = array<i32>} : memref<512x128xbf16, #tpu.memory_space<vmem>>, vector<512x128xbf16>,
    return
  }
  func.func @transform_0(%arg0: i32, %arg1: i32) -> (i32, i32) {
    %c0_i32 = arith.constant 0 : i32
    %c0_i32_0 = arith.constant 0 : i32
    return %arg0, %c0_i32 : i32, i32
  }
  func.func @transform_1(%arg0: i32, %arg1: i32) -> (i32, i32) {
    %c0_i32 = arith.constant 0 : i32
    %c0_i32_0 = arith.constant 0 : i32
    return %c0_i32, %arg1 : i32, i32
  }
  func.func @transform_2(%arg0: i32, %arg1: i32) -> (i32, i32) {
    %c0_i32 = arith.constant 0 : i32
    %c0_i32_0 = arith.constant 0 : i32
    return %c0_i32, %arg1 : i32, i32
  }
  func.func @transform_3(%arg0: i32, %arg1: i32) -> (i32, i32) {
    %c0_i32 = arith.constant 0 : i32
    return %arg0, %arg1 : i32, i32
  }
}

</mosaic_0001>

<llo_original>
// kernel: tpu_custom_call.1
$region0: #{tpu_custom_call.1}
  #allocation0 [shape = 'u32[]', space=smem, size = 0x4, offset = 0x4, fixed_abs, tag = 'smem constant byte address 0x4 - core index']
  #allocation1 [shape = 'u32[144,128]{1,0:T(1,128)}', space=vmem, size = 0x12000, scoped, tag = 'internal scratch']
  %s0 = inlined_call_operand.hbm [shape: bf16[2048,128], index: 0, kind: input, shape index: {}]
  %s1 = inlined_call_operand.hbm [shape: bf16[128,128], index: 1, kind: input, shape index: {}]
  %s2 = inlined_call_operand.vmem [shape: f32[1,128], index: 2, kind: input, shape index: {}]
  %s3 = inlined_call_operand.hbm [shape: bf16[2048,128], index: 3, kind: output, shape index: {}]
  %s4 = sld [smem:[#allocation0]]
  $region53: #{tpu_custom_call.1} parent=0
    _
  %s6 = ssub.s32 1, %s4
  %s7 = scalar_select 0, %s6, %s4
  $region1: #{tpu_custom_call.1} parent=0
    #allocation2 [shape = 'u8[262144]{0}', space=vmem, size = 0x40000, scoped, tag = 'input window, operand 0']
    #allocation3 [shape = 's32[2]{0}', space=sflag, size = 0x8, scoped, tag = 'scoped memory for tpu_custom_call.1']
    #allocation4 [shape = 's32[2]{0}', space=sflag, size = 0x8, scoped, tag = 'scoped memory for tpu_custom_call.1']
    #allocation5 [shape = 'u8[32768]{0}', space=vmem, size = 0x8000, scoped, tag = 'input window, operand 1, single buffered']
    #allocation6 [shape = 's32[1]{0}', space=sflag, size = 0x4, scoped, tag = 'scoped memory for tpu_custom_call.1']
    #allocation7 [shape = 'u8[262144]{0}', space=vmem, size = 0x40000, scoped, tag = 'output window, operand 0']
    %8 = vsyncpa [#allocation3], 0
    %s9 = scalar_lea.sflag [#allocation3], 1
    %10 = vsyncpa %s9, 0
    %11 = vsyncpa [#allocation6], 0
    %12 = vsyncpa [#allocation4], 0
    %s13 = scalar_lea.sflag [#allocation4], 1
    %14 = vsyncpa %s13, 0
    loop: start=0, step=1, limit=6
    $region2: #{tpu_custom_call.1} parent=1 // loop_pre_header
      _
    $region3: #{tpu_custom_call.1} parent=1 // loop_header
      %s16 = sphi 0, %s20
      %p17 = scmp.ge.s32.totalorder %s16, 6
      %s23 = sphi 0, %s35
      %s24 = sphi 0, %s31
      %s25 = sphi 0, %s23
      %s26 = sphi 0, %s24
      %s27 = sphi 0, %s25
      %s28 = sphi 0, %s26
      %s38 = sphi 0, %s40
      %s41 = sphi 0, %s38
      %s42 = sphi 0, %s41
      %s58 = sphi 0, %s42
      %s64 = sphi 0, %s66
      %s67 = sphi 0, %s64
      %s68 = sphi 0, %s67
      %s84 = sphi 0, %s68
      %s90 = sphi 0, %s92
      %s93 = sphi 0, %s90
      %s94 = sphi 0, %s93
      %s110 = sphi 0, %s94
      %s118 = sphi 0, %s120
      %s121 = sphi 0, %s118
      %s122 = sphi 0, %s121
      %s138 = sphi 0, %s122
    $region4: #{tpu_custom_call.1} parent=1 // loop_header_branch
      %19 = sbr.rel (%p17) target = $region8
    $region5: #{tpu_custom_call.1} parent=1 // loop_body
      %s21 = ssub.s32 %s16, 1
      %s22 = ssub.s32 %s16, 2
      %s29 = sadd.s32 1, %s24
      %p30 = scmp.ge.s32.totalorder %s29, 1
      %s31 = scalar_select %p30, 0, %s29
      %s32 = sadd.s32 1, %s23
      %s33 = scalar_select %p30, %s32, %s23
      %p34 = scmp.ge.s32.totalorder %s33, 4
      %s35 = scalar_select %p34, 0, %s33
      %s36 = ssub.s32 %s23, %s35
      %p37 = scmp.eq.s32.totalorder %s36, 0
      %s39 = sadd.s32 %s38, 1
      %s40 = scalar_select %p37, %s38, %s39
      %p43 = pneg %p37
      %p44 = scmp.eq.s32.totalorder %s16, 3
      %p45 = por %p43, %p44
      %p46 = scmp.ne.s32.totalorder %s38, %s41
      %p47 = scmp.eq.s32.totalorder %s16, 0
      %p48 = por %p46, %p47
      %p49 = scmp.ne.s32.totalorder %s38, %s41
      %p50 = scmp.eq.s32.totalorder %s21, 3
      %p51 = por %p49, %p50
      %p52 = scmp.ne.s32.totalorder %s41, %s42
      %p53 = scmp.eq.s32.totalorder %s21, 0
      %p54 = por %p52, %p53
      %p55 = scmp.ne.s32.totalorder %s41, %s42
      %p56 = scmp.eq.s32.totalorder %s22, 3
      %p57 = por %p55, %p56
      %p59 = scmp.ne.s32.totalorder %s42, %s58
      %p60 = scmp.eq.s32.totalorder %s22, 0
      %p61 = por %p59, %p60
      %s62 = ssub.s32 %s24, %s31
      %p63 = scmp.eq.s32.totalorder %s62, 0
      %s65 = sadd.s32 %s64, 1
      %s66 = scalar_select %p63, %s64, %s65
      %p69 = pneg %p63
      %p70 = scmp.eq.s32.totalorder %s16, 3
      %p71 = por %p69, %p70
      %p72 = scmp.ne.s32.totalorder %s64, %s67
      %p73 = scmp.eq.s32.totalorder %s16, 0
      %p74 = por %p72, %p73
      %p75 = scmp.ne.s32.totalorder %s64, %s67
      %p76 = scmp.eq.s32.totalorder %s21, 3
      %p77 = por %p75, %p76
      %p78 = scmp.ne.s32.totalorder %s67, %s68
      %p79 = scmp.eq.s32.totalorder %s21, 0
      %p80 = por %p78, %p79
      %p81 = scmp.ne.s32.totalorder %s67, %s68
      %p82 = scmp.eq.s32.totalorder %s22, 3
      %p83 = por %p81, %p82
      %p85 = scmp.ne.s32.totalorder %s68, %s84
      %p86 = scmp.eq.s32.totalorder %s22, 0
      %p87 = por %p85, %p86
      %s88 = ssub.s32 %s24, %s31
      %p89 = scmp.eq.s32.totalorder %s88, 0
      %s91 = sadd.s32 %s90, 1
      %s92 = scalar_select %p89, %s90, %s91
      %p95 = pneg %p89
      %p96 = scmp.eq.s32.totalorder %s16, 3
      %p97 = por %p95, %p96
      %p98 = scmp.ne.s32.totalorder %s90, %s93
      %p99 = scmp.eq.s32.totalorder %s16, 0
      %p100 = por %p98, %p99
      %p101 = scmp.ne.s32.totalorder %s90, %s93
      %p102 = scmp.eq.s32.totalorder %s21, 3
      %p103 = por %p101, %p102
      %p104 = scmp.ne.s32.totalorder %s93, %s94
      %p105 = scmp.eq.s32.totalorder %s21, 0
      %p106 = por %p104, %p105
      %p107 = scmp.ne.s32.totalorder %s93, %s94
      %p108 = scmp.eq.s32.totalorder %s22, 3
      %p109 = por %p107, %p108
      %p111 = scmp.ne.s32.totalorder %s94, %s110
      %p112 = scmp.eq.s32.totalorder %s22, 0
      %p113 = por %p111, %p112
      %s114 = ssub.s32 %s23, %s35
      %s115 = ssub.s32 %s24, %s31
      %s116 = sor.u32 %s114, %s115
      %p117 = scmp.eq.s32.totalorder %s116, 0
      %s119 = sadd.s32 %s118, 1
      %s120 = scalar_select %p117, %s118, %s119
      %p123 = pneg %p117
      %p124 = scmp.eq.s32.totalorder %s16, 3
      %p125 = por %p123, %p124
      %p126 = scmp.ne.s32.totalorder %s118, %s121
      %p127 = scmp.eq.s32.totalorder %s16, 0
      %p128 = por %p126, %p127
      %p129 = scmp.ne.s32.totalorder %s118, %s121
      %p130 = scmp.eq.s32.totalorder %s21, 3
      %p131 = por %p129, %p130
      %p132 = scmp.ne.s32.totalorder %s121, %s122
      %p133 = scmp.eq.s32.totalorder %s21, 0
      %p134 = por %p132, %p133
      %p135 = scmp.ne.s32.totalorder %s121, %s122
      %p136 = scmp.eq.s32.totalorder %s22, 3
      %p137 = por %p135, %p136
      %p139 = scmp.ne.s32.totalorder %s122, %s138
      %p140 = scmp.eq.s32.totalorder %s22, 0
      %p141 = por %p139, %p140
      %p142 = scmp.le.s32.totalorder 1, %s16
      %p143 = scmp.lt.s32.totalorder %s16, 5
      %p144 = pnand %p142, %p143
      %p145 = pneg %p144
      // Predicated region
      $region9: #{tpu_custom_call.1} parent=5 // pred_check
        _
      $region10: #{tpu_custom_call.1} parent=5 // pred_check_branch
        %147 = sbr.rel (%p144) target = $region12
      $region11: #{tpu_custom_call.1} parent=5 // pred_region
        %s148 = ssub.s32 %s16, 1
        // Predicated region
        $region13: #{tpu_custom_call.1} parent=11 // pred_check
          %p149 = pneg %p80
        $region14: #{tpu_custom_call.1} parent=11 // pred_check_branch
          %151 = sbr.rel (%p149) target = $region16
        $region15: #{tpu_custom_call.1} parent=11 // pred_region
          %s153 = ssub.s32 1024, 1024
          %154 = vsyncadd [#allocation6], %s153
          %s155 = smul.addr %s26, 64
          %s156 = scalar_lea.hbm %s1, %s155
          %s157 = sshll.u32 [#allocation5], 4
          %s158 = int_to_ptr.vmem [resolvable:$true] %s157
          %163 = dma.hbm_to_vmem [thread:$0]  %s156, 1024, %s158, [#allocation6], 64, 64, 4
        $region16: #{tpu_custom_call.1} parent=11 // pred_fallthru
          _
        // Predicated region
        $region17: #{tpu_custom_call.1} parent=11 // pred_check
          %p164 = pneg %p106
        $region18: #{tpu_custom_call.1} parent=11 // pred_check_branch
          %166 = sbr.rel (%p164) target = $region20
        $region19: #{tpu_custom_call.1} parent=11 // pred_region
          %p167 = scmp.lt.s32.totalorder %s26, 0
          %s168 = scalar_select %p167, %s26, 0
          %s169 = scalar_lea.vmem %s2, %s168
        $region20: #{tpu_custom_call.1} parent=11 // pred_fallthru
          _
      $region12: #{tpu_custom_call.1} parent=5 // pred_fallthru
        _
      %p170 = scmp.lt.s32.totalorder %s16, 4
      // Predicated region
      $region21: #{tpu_custom_call.1} parent=5 // pred_check
        %p171 = pneg %p170
      $region22: #{tpu_custom_call.1} parent=5 // pred_check_branch
        %173 = sbr.rel (%p171) target = $region24
      $region23: #{tpu_custom_call.1} parent=5 // pred_region
        // Predicated region
        $region25: #{tpu_custom_call.1} parent=23 // pred_check
          %p174 = pneg %p48
        $region26: #{tpu_custom_call.1} parent=23 // pred_check_branch
          %176 = sbr.rel (%p174) target = $region28
        $region27: #{tpu_custom_call.1} parent=23 // pred_region
          %s177 = sand.u32 %s38, 1
          %s178 = scalar_lea.sflag [#allocation3], %s177
          %s179 = sand.u32 %s38, 1
          %s180 = smul.addr %s179, 256
          %s181 = scalar_lea.vmem [#allocation2], %s180
          %s182 = smul.u32 64, %s23
          %s184 = ssub.s32 4096, 4096
          %185 = vsyncadd %s178, %s184
          %s186 = smul.addr %s182, 64
          %s187 = scalar_lea.hbm %s0, %s186
          %s188 = sshll.u32 %s181, 4
          %s189 = int_to_ptr.vmem [resolvable:$true] %s188
          %194 = dma.hbm_to_vmem [thread:$0]  %s187, 4096, %s189, %s178, 64, 64, 4
        $region28: #{tpu_custom_call.1} parent=23 // pred_fallthru
          _
      $region24: #{tpu_custom_call.1} parent=5 // pred_fallthru
        _
      %p195 = scmp.le.s32.totalorder 1, %s16
      %p196 = scmp.lt.s32.totalorder %s16, 5
      %p197 = pnand %p195, %p196
      %p198 = pneg %p197
      // Predicated region
      $region29: #{tpu_custom_call.1} parent=5 // pred_check
        _
      $region30: #{tpu_custom_call.1} parent=5 // pred_check_branch
        %200 = sbr.rel (%p197) target = $region32
      $region31: #{tpu_custom_call.1} parent=5 // pred_region
        %s201 = ssub.s32 %s16, 1
        %s202 = sand.u32 %s41, 1
        %s203 = scalar_lea.sflag [#allocation3], %s202
        %s204 = sand.u32 %s41, 1
        %s205 = smul.addr %s204, 256
        %s206 = scalar_lea.vmem [#allocation2], %s205
        // Predicated region
        $region33: #{tpu_custom_call.1} parent=31 // pred_check
          %p207 = pneg %p54
        $region34: #{tpu_custom_call.1} parent=31 // pred_check_branch
          %209 = sbr.rel (%p207) target = $region36
        $region35: #{tpu_custom_call.1} parent=31 // pred_region
          %210 = dma.done %s203, 4096
        $region36: #{tpu_custom_call.1} parent=31 // pred_fallthru
          _
        // Predicated region
        $region37: #{tpu_custom_call.1} parent=31 // pred_check
          %p211 = pneg %p80
        $region38: #{tpu_custom_call.1} parent=31 // pred_check_branch
          %213 = sbr.rel (%p211) target = $region40
        $region39: #{tpu_custom_call.1} parent=31 // pred_region
          %214 = dma.done [#allocation6], 1024
        $region40: #{tpu_custom_call.1} parent=31 // pred_fallthru
          _
        %s215 = sand.u32 %s41, 1
        %s216 = scalar_lea.sflag [#allocation3], %s215
        %s217 = sand.u32 %s41, 1
        %s218 = smul.addr %s217, 256
        %s219 = scalar_lea.vmem [#allocation2], %s218
        %p220 = pneg %p54
        %p221 = pneg %p51
        %p222 = pneg %p80
        %p223 = pneg %p77
        %p224 = scmp.lt.s32.totalorder %s26, 0
        %s225 = scalar_select %p224, %s26, 0
        %s226 = scalar_lea.vmem %s2, %s225
        %p227 = pneg %p106
        %p228 = pneg %p103
        %p229 = pneg %p134
        %p230 = pneg %p131
        %s231 = sand.u32 %s121, 1
        %s232 = scalar_lea.sflag [#allocation4], %s231
        %s233 = sand.u32 %s121, 1
        %s234 = smul.addr %s233, 256
        %s235 = scalar_lea.vmem [#allocation7], %s234
        %s236 = smul.u32 64, %s25
        %p237 = scmp.lt.s32.totalorder %s26, 0
        %s238 = scalar_select %p237, %s26, 0
        %s239 = scalar_lea.vmem %s2, %s238
        %s240 = smul.u32 64, %s25
        %v242 = vld [vmem:[%s206] sm:$0xf]
        %v243 = vld [vmem:[%s206 + $0x4] sm:$0xf]
        %v244 = vld [vmem:[%s206 + $0x8] sm:$0xf]
        %v245 = vld [vmem:[%s206 + $0xc] sm:$0xf]
        %v246 = vld [vmem:[%s206 + $0x10] sm:$0xf]
        %v247 = vld [vmem:[%s206 + $0x14] sm:$0xf]
        %v248 = vld [vmem:[%s206 + $0x18] sm:$0xf]
        %v249 = vld [vmem:[%s206 + $0x1c] sm:$0xf]
        %v250 = vld [vmem:[%s206 + $0x20] sm:$0xf]
        %v251 = vld [vmem:[%s206 + $0x24] sm:$0xf]
        %v252 = vld [vmem:[%s206 + $0x28] sm:$0xf]
        %v253 = vld [vmem:[%s206 + $0x2c] sm:$0xf]
        %v254 = vld [vmem:[%s206 + $0x30] sm:$0xf]
        %v255 = vld [vmem:[%s206 + $0x34] sm:$0xf]
        %v256 = vld [vmem:[%s206 + $0x38] sm:$0xf]
        %v257 = vld [vmem:[%s206 + $0x3c] sm:$0xf]
        %v258 = vld [vmem:[%s206 + $0x40] sm:$0xf]
        %v259 = vld [vmem:[%s206 + $0x44] sm:$0xf]
        %v260 = vld [vmem:[%s206 + $0x48] sm:$0xf]
        %v261 = vld [vmem:[%s206 + $0x4c] sm:$0xf]
        %v262 = vld [vmem:[%s206 + $0x50] sm:$0xf]
        %v263 = vld [vmem:[%s206 + $0x54] sm:$0xf]
        %v264 = vld [vmem:[%s206 + $0x58] sm:$0xf]
        %v265 = vld [vmem:[%s206 + $0x5c] sm:$0xf]
        %v266 = vld [vmem:[%s206 + $0x60] sm:$0xf]
        %v267 = vld [vmem:[%s206 + $0x64] sm:$0xf]
        %v268 = vld [vmem:[%s206 + $0x68] sm:$0xf]
        %v269 = vld [vmem:[%s206 + $0x6c] sm:$0xf]
        %v270 = vld [vmem:[%s206 + $0x70] sm:$0xf]
        %v271 = vld [vmem:[%s206 + $0x74] sm:$0xf]
        %v272 = vld [vmem:[%s206 + $0x78] sm:$0xf]
        %v273 = vld [vmem:[%s206 + $0x7c] sm:$0xf]
        %v274 = vld [vmem:[%s206 + $0x80] sm:$0xf]
        %v275 = vld [vmem:[%s206 + $0x84] sm:$0xf]
        %v276 = vld [vmem:[%s206 + $0x88] sm:$0xf]
        %v277 = vld [vmem:[%s206 + $0x8c] sm:$0xf]
        %v278 = vld [vmem:[%s206 + $0x90] sm:$0xf]
        %v279 = vld [vmem:[%s206 + $0x94] sm:$0xf]
        %v280 = vld [vmem:[%s206 + $0x98] sm:$0xf]
        %v281 = vld [vmem:[%s206 + $0x9c] sm:$0xf]
        %v282 = vld [vmem:[%s206 + $0xa0] sm:$0xf]
        %v283 = vld [vmem:[%s206 + $0xa4] sm:$0xf]
        %v284 = vld [vmem:[%s206 + $0xa8] sm:$0xf]
        %v285 = vld [vmem:[%s206 + $0xac] sm:$0xf]
        %v286 = vld [vmem:[%s206 + $0xb0] sm:$0xf]
        %v287 = vld [vmem:[%s206 + $0xb4] sm:$0xf]
        %v288 = vld [vmem:[%s206 + $0xb8] sm:$0xf]
        %v289 = vld [vmem:[%s206 + $0xbc] sm:$0xf]
        %v290 = vld [vmem:[%s206 + $0xc0] sm:$0xf]
        %v291 = vld [vmem:[%s206 + $0xc4] sm:$0xf]
        %v292 = vld [vmem:[%s206 + $0xc8] sm:$0xf]
        %v293 = vld [vmem:[%s206 + $0xcc] sm:$0xf]
        %v294 = vld [vmem:[%s206 + $0xd0] sm:$0xf]
        %v295 = vld [vmem:[%s206 + $0xd4] sm:$0xf]
        %v296 = vld [vmem:[%s206 + $0xd8] sm:$0xf]
        %v297 = vld [vmem:[%s206 + $0xdc] sm:$0xf]
        %v298 = vld [vmem:[%s206 + $0xe0] sm:$0xf]
        %v299 = vld [vmem:[%s206 + $0xe4] sm:$0xf]
        %v300 = vld [vmem:[%s206 + $0xe8] sm:$0xf]
        %v301 = vld [vmem:[%s206 + $0xec] sm:$0xf]
        %v302 = vld [vmem:[%s206 + $0xf0] sm:$0xf]
        %v303 = vld [vmem:[%s206 + $0xf4] sm:$0xf]
        %v304 = vld [vmem:[%s206 + $0xf8] sm:$0xf]
        %v305 = vld [vmem:[%s206 + $0xfc] sm:$0xf]
        %v306 = vld [vmem:[#allocation5] sm:$0xf]
        %v307 = vld [vmem:[#allocation5 + $0x4] sm:$0xf]
        %v308 = vld [vmem:[#allocation5 + $0x8] sm:$0xf]
        %v309 = vld [vmem:[#allocation5 + $0xc] sm:$0xf]
        %v310 = vld [vmem:[#allocation5 + $0x10] sm:$0xf]
        %v311 = vld [vmem:[#allocation5 + $0x14] sm:$0xf]
        %v312 = vld [vmem:[#allocation5 + $0x18] sm:$0xf]
        %v313 = vld [vmem:[#allocation5 + $0x1c] sm:$0xf]
        %v314 = vld [vmem:[#allocation5 + $0x20] sm:$0xf]
        %v315 = vld [vmem:[#allocation5 + $0x24] sm:$0xf]
        %v316 = vld [vmem:[#allocation5 + $0x28] sm:$0xf]
        %v317 = vld [vmem:[#allocation5 + $0x2c] sm:$0xf]
        %v318 = vld [vmem:[#allocation5 + $0x30] sm:$0xf]
        %v319 = vld [vmem:[#allocation5 + $0x34] sm:$0xf]
        %v320 = vld [vmem:[#allocation5 + $0x38] sm:$0xf]
        %v321 = vld [vmem:[#allocation5 + $0x3c] sm:$0xf]
        %v322 = vld [vmem:[%s239] sm:$0x1]
        %v324 = vlaneseq
        %v325 = vshrl.u32 %v324, 7
        %v326 = vsub.s32 0, %v325
        %v327 = vrot.slane %v322, %v326
        %v393 = vunpack.c.l.b16 %v242
        %v394 = vunpack.c.l.b16 %v243
        %v395 = vunpack.c.l.b16 %v244
        %v396 = vunpack.c.l.b16 %v245
        %v397 = vunpack.c.l.b16 %v246
        %v398 = vunpack.c.l.b16 %v247
        %v399 = vunpack.c.l.b16 %v248
        %v400 = vunpack.c.l.b16 %v249
        %v401 = vunpack.c.l.b16 %v250
        %v402 = vunpack.c.l.b16 %v251
        %v403 = vunpack.c.l.b16 %v252
        %v404 = vunpack.c.l.b16 %v253
        %v405 = vunpack.c.l.b16 %v254
        %v406 = vunpack.c.l.b16 %v255
        %v407 = vunpack.c.l.b16 %v256
        %v408 = vunpack.c.l.b16 %v257
        %v409 = vunpack.c.l.b16 %v258
        %v410 = vunpack.c.l.b16 %v259
        %v411 = vunpack.c.l.b16 %v260
        %v412 = vunpack.c.l.b16 %v261
        %v413 = vunpack.c.l.b16 %v262
        %v414 = vunpack.c.l.b16 %v263
        %v415 = vunpack.c.l.b16 %v264
        %v416 = vunpack.c.l.b16 %v265
        %v417 = vunpack.c.l.b16 %v266
        %v418 = vunpack.c.l.b16 %v267
        %v419 = vunpack.c.l.b16 %v268
        %v420 = vunpack.c.l.b16 %v269
        %v421 = vunpack.c.l.b16 %v270
        %v422 = vunpack.c.l.b16 %v271
        %v423 = vunpack.c.l.b16 %v272
        %v424 = vunpack.c.l.b16 %v273
        %v425 = vunpack.c.l.b16 %v274
        %v426 = vunpack.c.l.b16 %v275
        %v427 = vunpack.c.l.b16 %v276
        %v428 = vunpack.c.l.b16 %v277
        %v429 = vunpack.c.l.b16 %v278
        %v430 = vunpack.c.l.b16 %v279
        %v431 = vunpack.c.l.b16 %v280
        %v432 = vunpack.c.l.b16 %v281
        %v433 = vunpack.c.l.b16 %v282
        %v434 = vunpack.c.l.b16 %v283
        %v435 = vunpack.c.l.b16 %v284
        %v436 = vunpack.c.l.b16 %v285
        %v437 = vunpack.c.l.b16 %v286
        %v438 = vunpack.c.l.b16 %v287
        %v439 = vunpack.c.l.b16 %v288
        %v440 = vunpack.c.l.b16 %v289
        %v441 = vunpack.c.l.b16 %v290
        %v442 = vunpack.c.l.b16 %v291
        %v443 = vunpack.c.l.b16 %v292
        %v444 = vunpack.c.l.b16 %v293
        %v445 = vunpack.c.l.b16 %v294
        %v446 = vunpack.c.l.b16 %v295
        %v447 = vunpack.c.l.b16 %v296
        %v448 = vunpack.c.l.b16 %v297
        %v449 = vunpack.c.l.b16 %v298
        %v450 = vunpack.c.l.b16 %v299
        %v451 = vunpack.c.l.b16 %v300
        %v452 = vunpack.c.l.b16 %v301
        %v453 = vunpack.c.l.b16 %v302
        %v454 = vunpack.c.l.b16 %v303
        %v455 = vunpack.c.l.b16 %v304
        %v456 = vunpack.c.l.b16 %v305
        %v457 = vpack.c.b16 %v394, %v393
        %v458 = vpack.c.b16 %v396, %v395
        %v459 = vpack.c.b16 %v398, %v397
        %v460 = vpack.c.b16 %v400, %v399
        %v461 = vpack.c.b16 %v402, %v401
        %v462 = vpack.c.b16 %v404, %v403
        %v463 = vpack.c.b16 %v406, %v405
        %v464 = vpack.c.b16 %v408, %v407
        %v465 = vpack.c.b16 %v410, %v409
        %v466 = vpack.c.b16 %v412, %v411
        %v467 = vpack.c.b16 %v414, %v413
        %v468 = vpack.c.b16 %v416, %v415
        %v469 = vpack.c.b16 %v418, %v417
        %v470 = vpack.c.b16 %v420, %v419
        %v471 = vpack.c.b16 %v422, %v421
        %v472 = vpack.c.b16 %v424, %v423
        %v473 = vpack.c.b16 %v426, %v425
        %v474 = vpack.c.b16 %v428, %v427
        %v475 = vpack.c.b16 %v430, %v429
        %v476 = vpack.c.b16 %v432, %v431
        %v477 = vpack.c.b16 %v434, %v433
        %v478 = vpack.c.b16 %v436, %v435
        %v479 = vpack.c.b16 %v438, %v437
        %v480 = vpack.c.b16 %v440, %v439
        %v481 = vpack.c.b16 %v442, %v441
        %v482 = vpack.c.b16 %v444, %v443
        %v483 = vpack.c.b16 %v446, %v445
        %v484 = vpack.c.b16 %v448, %v447
        %v485 = vpack.c.b16 %v450, %v449
        %v486 = vpack.c.b16 %v452, %v451
        %v487 = vpack.c.b16 %v454, %v453
        %v488 = vpack.c.b16 %v456, %v455
        %v537 = vunpack.c.l.b16 %v306
        %v538 = vunpack.c.l.b16 %v307
        %v539 = vunpack.c.l.b16 %v308
        %v540 = vunpack.c.l.b16 %v309
        %v541 = vunpack.c.l.b16 %v310
        %v542 = vunpack.c.l.b16 %v311
        %v543 = vunpack.c.l.b16 %v312
        %v544 = vunpack.c.l.b16 %v313
        %v545 = vunpack.c.l.b16 %v314
        %v546 = vunpack.c.l.b16 %v315
        %v547 = vunpack.c.l.b16 %v316
        %v548 = vunpack.c.l.b16 %v317
        %v549 = vunpack.c.l.b16 %v318
        %v550 = vunpack.c.l.b16 %v319
        %v551 = vunpack.c.l.b16 %v320
        %v552 = vunpack.c.l.b16 %v321
        %v553 = vpack.c.b16 %v538, %v537
        %v554 = vpack.c.b16 %v540, %v539
        %v555 = vpack.c.b16 %v542, %v541
        %v556 = vpack.c.b16 %v544, %v543
        %v557 = vpack.c.b16 %v546, %v545
        %v558 = vpack.c.b16 %v548, %v547
        %v559 = vpack.c.b16 %v550, %v549
        %v560 = vpack.c.b16 %v552, %v551
        %569 = vmatprep.subr.bf16.mxu0 0
        %570 = vmatpush1.bf16.msra.mxu0 %v560
        %571 = vmatprep.subr.bf16.mxu0 0
        %572 = vmatpush1.bf16.msra.mxu0 %v559
        %573 = vmatprep.subr.bf16.mxu0 0
        %574 = vmatpush1.bf16.msra.mxu0 %v558
        %575 = vmatprep.subr.bf16.mxu0 0
        %576 = vmatpush1.bf16.msra.mxu0 %v557
        %577 = vmatprep.subr.bf16.mxu0 0
        %578 = vmatpush1.bf16.msra.mxu0 %v556
        %579 = vmatprep.subr.bf16.mxu0 0
        %580 = vmatpush1.bf16.msra.mxu0 %v555
        %581 = vmatprep.subr.bf16.mxu0 0
        %582 = vmatpush1.bf16.msra.mxu0 %v554
        %583 = vmatprep.subr.bf16.mxu0 0
        %584 = vmatpush1.bf16.msra.mxu0 %v553
        %585 = vmatprep.subr.bf16.mxu0 0
        %586 = vmatpush2.bf16.msra.mxu0 0
        %587 = vmatprep.subr.bf16.mxu0 0
        %588 = vmatpush2.bf16.msra.mxu0 0
        %589 = vmatprep.subr.bf16.mxu0 0
        %590 = vmatpush2.bf16.msra.mxu0 0
        %591 = vmatprep.subr.bf16.mxu0 0
        %592 = vmatpush2.bf16.msra.mxu0 0
        %593 = vmatprep.subr.bf16.mxu0 0
        %594 = vmatpush2.bf16.msra.mxu0 0
        %595 = vmatprep.subr.bf16.mxu0 0
        %596 = vmatpush2.bf16.msra.mxu0 0
        %597 = vmatprep.subr.bf16.mxu0 0
        %598 = vmatpush2.bf16.msra.mxu0 0
        %599 = vmatprep.subr.bf16.mxu0 0
        %600 = vmatpush2.bf16.msra.mxu0 0
        %601 = vmatprep.mubr.bf16.mxu0 0
        %602 = vmatmul.mubr.bf16.gmra.mxu0 %v457
        %v603 = vpop.f32.mrf.mxu0
        %v604 = vadd.f32 %v327, %v603
        %v605 = vpop.f32.mrf.mxu0
        %v606 = vpop.f32.mrf.mxu0
        %v607 = vadd.f32 %v327, %v606
        %v608 = vpop.f32.mrf.mxu0
        %609 = vmatprep.mubr.bf16.mxu0 0
        %610 = vmatmul.mubr.bf16.gmra.mxu0 %v458
        %v611 = vpop.f32.mrf.mxu0
        %v612 = vadd.f32 %v327, %v611
        %v613 = vpop.f32.mrf.mxu0
        %v614 = vpop.f32.mrf.mxu0
        %v615 = vadd.f32 %v327, %v614
        %v616 = vpop.f32.mrf.mxu0
        %617 = vmatprep.mubr.bf16.mxu0 0
        %618 = vmatmul.mubr.bf16.gmra.mxu0 %v459
        %v619 = vpop.f32.mrf.mxu0
        %v620 = vadd.f32 %v327, %v619
        %v621 = vpop.f32.mrf.mxu0
        %v622 = vpop.f32.mrf.mxu0
        %v623 = vadd.f32 %v327, %v622
        %v624 = vpop.f32.mrf.mxu0
        %625 = vmatprep.mubr.bf16.mxu0 0
        %626 = vmatmul.mubr.bf16.gmra.mxu0 %v460
        %v627 = vpop.f32.mrf.mxu0
        %v628 = vadd.f32 %v327, %v627
        %v629 = vpop.f32.mrf.mxu0
        %v630 = vpop.f32.mrf.mxu0
        %v631 = vadd.f32 %v327, %v630
        %v632 = vpop.f32.mrf.mxu0
        %633 = vmatprep.mubr.bf16.mxu0 0
        %634 = vmatmul.mubr.bf16.gmra.mxu0 %v461
        %v635 = vpop.f32.mrf.mxu0
        %v636 = vadd.f32 %v327, %v635
        %v637 = vpop.f32.mrf.mxu0
        %v638 = vpop.f32.mrf.mxu0
        %v639 = vadd.f32 %v327, %v638
        %v640 = vpop.f32.mrf.mxu0
        %641 = vmatprep.mubr.bf16.mxu0 0
        %642 = vmatmul.mubr.bf16.gmra.mxu0 %v462
        %v643 = vpop.f32.mrf.mxu0
        %v644 = vadd.f32 %v327, %v643
        %v645 = vpop.f32.mrf.mxu0
        %v646 = vpop.f32.mrf.mxu0
        %v647 = vadd.f32 %v327, %v646
        %v648 = vpop.f32.mrf.mxu0
        %649 = vmatprep.mubr.bf16.mxu0 0
        %650 = vmatmul.mubr.bf16.gmra.mxu0 %v463
        %v651 = vpop.f32.mrf.mxu0
        %v652 = vadd.f32 %v327, %v651
        %v653 = vpop.f32.mrf.mxu0
        %v654 = vpop.f32.mrf.mxu0
        %v655 = vadd.f32 %v327, %v654
        %v656 = vpop.f32.mrf.mxu0
        %657 = vmatprep.mubr.bf16.mxu0 0
        %658 = vmatmul.mubr.bf16.gmra.mxu0 %v464
        %v659 = vpop.f32.mrf.mxu0
        %v660 = vadd.f32 %v327, %v659
        %v661 = vpop.f32.mrf.mxu0
        %v662 = vpop.f32.mrf.mxu0
        %v663 = vadd.f32 %v327, %v662
        %v664 = vpop.f32.mrf.mxu0
        %665 = vmatprep.mubr.bf16.mxu0 0
        %666 = vmatmul.mubr.bf16.gmra.mxu0 %v465
        %v667 = vpop.f32.mrf.mxu0
        %v668 = vadd.f32 %v327, %v667
        %v669 = vpop.f32.mrf.mxu0
        %v670 = vpop.f32.mrf.mxu0
        %v671 = vadd.f32 %v327, %v670
        %v672 = vpop.f32.mrf.mxu0
        %673 = vmatprep.mubr.bf16.mxu0 0
        %674 = vmatmul.mubr.bf16.gmra.mxu0 %v466
        %v675 = vpop.f32.mrf.mxu0
        %v676 = vadd.f32 %v327, %v675
        %v677 = vpop.f32.mrf.mxu0
        %v678 = vpop.f32.mrf.mxu0
        %v679 = vadd.f32 %v327, %v678
        %v680 = vpop.f32.mrf.mxu0
        %681 = vmatprep.mubr.bf16.mxu0 0
        %682 = vmatmul.mubr.bf16.gmra.mxu0 %v467
        %v683 = vpop.f32.mrf.mxu0
        %v684 = vadd.f32 %v327, %v683
        %v685 = vpop.f32.mrf.mxu0
        %v686 = vpop.f32.mrf.mxu0
        %v687 = vadd.f32 %v327, %v686
        %v688 = vpop.f32.mrf.mxu0
        %689 = vmatprep.mubr.bf16.mxu0 0
        %690 = vmatmul.mubr.bf16.gmra.mxu0 %v468
        %v691 = vpop.f32.mrf.mxu0
        %v692 = vadd.f32 %v327, %v691
        %v693 = vpop.f32.mrf.mxu0
        %v694 = vpop.f32.mrf.mxu0
        %v695 = vadd.f32 %v327, %v694
        %v696 = vpop.f32.mrf.mxu0
        %697 = vmatprep.mubr.bf16.mxu0 0
        %698 = vmatmul.mubr.bf16.gmra.mxu0 %v469
        %v699 = vpop.f32.mrf.mxu0
        %v700 = vadd.f32 %v327, %v699
        %v701 = vpop.f32.mrf.mxu0
        %v702 = vpop.f32.mrf.mxu0
        %v703 = vadd.f32 %v327, %v702
        %v704 = vpop.f32.mrf.mxu0
        %705 = vmatprep.mubr.bf16.mxu0 0
        %706 = vmatmul.mubr.bf16.gmra.mxu0 %v470
        %v707 = vpop.f32.mrf.mxu0
        %v708 = vadd.f32 %v327, %v707
        %v709 = vpop.f32.mrf.mxu0
        %v710 = vpop.f32.mrf.mxu0
        %v711 = vadd.f32 %v327, %v710
        %v712 = vpop.f32.mrf.mxu0
        %713 = vmatprep.mubr.bf16.mxu0 0
        %714 = vmatmul.mubr.bf16.gmra.mxu0 %v471
        %v715 = vpop.f32.mrf.mxu0
        %v716 = vadd.f32 %v327, %v715
        %v717 = vpop.f32.mrf.mxu0
        %v718 = vpop.f32.mrf.mxu0
        %v719 = vadd.f32 %v327, %v718
        %v720 = vpop.f32.mrf.mxu0
        %721 = vmatprep.mubr.bf16.mxu0 0
        %722 = vmatmul.mubr.bf16.gmra.mxu0 %v472
        %v723 = vpop.f32.mrf.mxu0
        %v724 = vadd.f32 %v327, %v723
        %v725 = vpop.f32.mrf.mxu0
        %v726 = vpop.f32.mrf.mxu0
        %v727 = vadd.f32 %v327, %v726
        %v728 = vpop.f32.mrf.mxu0
        %729 = vmatprep.mubr.bf16.mxu0 0
        %730 = vmatmul.mubr.bf16.gmra.mxu0 %v473
        %v731 = vpop.f32.mrf.mxu0
        %v732 = vadd.f32 %v327, %v731
        %v733 = vpop.f32.mrf.mxu0
        %v734 = vpop.f32.mrf.mxu0
        %v735 = vadd.f32 %v327, %v734
        %v736 = vpop.f32.mrf.mxu0
        %737 = vmatprep.mubr.bf16.mxu0 0
        %738 = vmatmul.mubr.bf16.gmra.mxu0 %v474
        %v739 = vpop.f32.mrf.mxu0
        %v740 = vadd.f32 %v327, %v739
        %v741 = vpop.f32.mrf.mxu0
        %v742 = vpop.f32.mrf.mxu0
        %v743 = vadd.f32 %v327, %v742
        %v744 = vpop.f32.mrf.mxu0
        %745 = vmatprep.mubr.bf16.mxu0 0
        %746 = vmatmul.mubr.bf16.gmra.mxu0 %v475
        %v747 = vpop.f32.mrf.mxu0
        %v748 = vadd.f32 %v327, %v747
        %v749 = vpop.f32.mrf.mxu0
        %v750 = vpop.f32.mrf.mxu0
        %v751 = vadd.f32 %v327, %v750
        %v752 = vpop.f32.mrf.mxu0
        %753 = vmatprep.mubr.bf16.mxu0 0
        %754 = vmatmul.mubr.bf16.gmra.mxu0 %v476
        %v755 = vpop.f32.mrf.mxu0
        %v756 = vadd.f32 %v327, %v755
        %v757 = vpop.f32.mrf.mxu0
        %v758 = vpop.f32.mrf.mxu0
        %v759 = vadd.f32 %v327, %v758
        %v760 = vpop.f32.mrf.mxu0
        %761 = vmatprep.mubr.bf16.mxu0 0
        %762 = vmatmul.mubr.bf16.gmra.mxu0 %v477
        %v763 = vpop.f32.mrf.mxu0
        %v764 = vadd.f32 %v327, %v763
        %v765 = vpop.f32.mrf.mxu0
        %v766 = vpop.f32.mrf.mxu0
        %v767 = vadd.f32 %v327, %v766
        %v768 = vpop.f32.mrf.mxu0
        %769 = vmatprep.mubr.bf16.mxu0 0
        %770 = vmatmul.mubr.bf16.gmra.mxu0 %v478
        %v771 = vpop.f32.mrf.mxu0
        %v772 = vadd.f32 %v327, %v771
        %v773 = vpop.f32.mrf.mxu0
        %v774 = vpop.f32.mrf.mxu0
        %v775 = vadd.f32 %v327, %v774
        %v776 = vpop.f32.mrf.mxu0
        %777 = vmatprep.mubr.bf16.mxu0 0
        %778 = vmatmul.mubr.bf16.gmra.mxu0 %v479
        %v779 = vpop.f32.mrf.mxu0
        %v780 = vadd.f32 %v327, %v779
        %v781 = vpop.f32.mrf.mxu0
        %v782 = vpop.f32.mrf.mxu0
        %v783 = vadd.f32 %v327, %v782
        %v784 = vpop.f32.mrf.mxu0
        %785 = vmatprep.mubr.bf16.mxu0 0
        %786 = vmatmul.mubr.bf16.gmra.mxu0 %v480
        %v787 = vpop.f32.mrf.mxu0
        %v788 = vadd.f32 %v327, %v787
        %v789 = vpop.f32.mrf.mxu0
        %v790 = vpop.f32.mrf.mxu0
        %v791 = vadd.f32 %v327, %v790
        %v792 = vpop.f32.mrf.mxu0
        %793 = vmatprep.mubr.bf16.mxu0 0
        %794 = vmatmul.mubr.bf16.gmra.mxu0 %v481
        %v795 = vpop.f32.mrf.mxu0
        %v796 = vadd.f32 %v327, %v795
        %v797 = vpop.f32.mrf.mxu0
        %v798 = vpop.f32.mrf.mxu0
        %v799 = vadd.f32 %v327, %v798
        %v800 = vpop.f32.mrf.mxu0
        %801 = vmatprep.mubr.bf16.mxu0 0
        %802 = vmatmul.mubr.bf16.gmra.mxu0 %v482
        %v803 = vpop.f32.mrf.mxu0
        %v804 = vadd.f32 %v327, %v803
        %v805 = vpop.f32.mrf.mxu0
        %v806 = vpop.f32.mrf.mxu0
        %v807 = vadd.f32 %v327, %v806
        %v808 = vpop.f32.mrf.mxu0
        %809 = vmatprep.mubr.bf16.mxu0 0
        %810 = vmatmul.mubr.bf16.gmra.mxu0 %v483
        %v811 = vpop.f32.mrf.mxu0
        %v812 = vadd.f32 %v327, %v811
        %v813 = vpop.f32.mrf.mxu0
        %v814 = vpop.f32.mrf.mxu0
        %v815 = vadd.f32 %v327, %v814
        %v816 = vpop.f32.mrf.mxu0
        %817 = vmatprep.mubr.bf16.mxu0 0
        %818 = vmatmul.mubr.bf16.gmra.mxu0 %v484
        %v819 = vpop.f32.mrf.mxu0
        %v820 = vadd.f32 %v327, %v819
        %v821 = vpop.f32.mrf.mxu0
        %v822 = vpop.f32.mrf.mxu0
        %v823 = vadd.f32 %v327, %v822
        %v824 = vpop.f32.mrf.mxu0
        %825 = vmatprep.mubr.bf16.mxu0 0
        %826 = vmatmul.mubr.bf16.gmra.mxu0 %v485
        %v827 = vpop.f32.mrf.mxu0
        %v828 = vadd.f32 %v327, %v827
        %v829 = vpop.f32.mrf.mxu0
        %v830 = vpop.f32.mrf.mxu0
        %v831 = vadd.f32 %v327, %v830
        %v832 = vpop.f32.mrf.mxu0
        %833 = vmatprep.mubr.bf16.mxu0 0
        %834 = vmatmul.mubr.bf16.gmra.mxu0 %v486
        %v835 = vpop.f32.mrf.mxu0
        %v836 = vadd.f32 %v327, %v835
        %v837 = vpop.f32.mrf.mxu0
        %v838 = vpop.f32.mrf.mxu0
        %v839 = vadd.f32 %v327, %v838
        %v840 = vpop.f32.mrf.mxu0
        %841 = vmatprep.mubr.bf16.mxu0 0
        %842 = vmatmul.mubr.bf16.gmra.mxu0 %v487
        %v843 = vpop.f32.mrf.mxu0
        %v844 = vadd.f32 %v327, %v843
        %v845 = vpop.f32.mrf.mxu0
        %v846 = vpop.f32.mrf.mxu0
        %v847 = vadd.f32 %v327, %v846
        %v848 = vpop.f32.mrf.mxu0
        %849 = vmatprep.mubr.bf16.mxu0 0
        %850 = vmatmul.mubr.bf16.gmra.mxu0 %v488
        %v851 = vpop.f32.mrf.mxu0
        %v852 = vadd.f32 %v327, %v851
        %v853 = vpop.f32.mrf.mxu0
        %v854 = vpop.f32.mrf.mxu0
        %v855 = vadd.f32 %v327, %v854
        %v856 = vpop.f32.mrf.mxu0
        %857 = vdwg.mxu0
        %v858 = vxor.u32 %v604, 2147483648
        %v859 = vxor.u32 %v607, 2147483648
        %v860 = vxor.u32 %v612, 2147483648
        %v861 = vxor.u32 %v615, 2147483648
        %v862 = vxor.u32 %v620, 2147483648
        %v863 = vxor.u32 %v623, 2147483648
        %v864 = vxor.u32 %v628, 2147483648
        %v865 = vxor.u32 %v631, 2147483648
        %v866 = vxor.u32 %v636, 2147483648
        %v867 = vxor.u32 %v639, 2147483648
        %v868 = vxor.u32 %v644, 2147483648
        %v869 = vxor.u32 %v647, 2147483648
        %v870 = vxor.u32 %v652, 2147483648
        %v871 = vxor.u32 %v655, 2147483648
        %v872 = vxor.u32 %v660, 2147483648
        %v873 = vxor.u32 %v663, 2147483648
        %v874 = vxor.u32 %v668, 2147483648
        %v875 = vxor.u32 %v671, 2147483648
        %v876 = vxor.u32 %v676, 2147483648
        %v877 = vxor.u32 %v679, 2147483648
        %v878 = vxor.u32 %v684, 2147483648
        %v879 = vxor.u32 %v687, 2147483648
        %v880 = vxor.u32 %v692, 2147483648
        %v881 = vxor.u32 %v695, 2147483648
        %v882 = vxor.u32 %v700, 2147483648
        %v883 = vxor.u32 %v703, 2147483648
        %v884 = vxor.u32 %v708, 2147483648
        %v885 = vxor.u32 %v711, 2147483648
        %v886 = vxor.u32 %v716, 2147483648
        %v887 = vxor.u32 %v719, 2147483648
        %v888 = vxor.u32 %v724, 2147483648
        %v889 = vxor.u32 %v727, 2147483648
        %v890 = vxor.u32 %v732, 2147483648
        %v891 = vxor.u32 %v735, 2147483648
        %v892 = vxor.u32 %v740, 2147483648
        %v893 = vxor.u32 %v743, 2147483648
        %v894 = vxor.u32 %v748, 2147483648
        %v895 = vxor.u32 %v751, 2147483648
        %v896 = vxor.u32 %v756, 2147483648
        %v897 = vxor.u32 %v759, 2147483648
        %v898 = vxor.u32 %v764, 2147483648
        %v899 = vxor.u32 %v767, 2147483648
        %v900 = vxor.u32 %v772, 2147483648
        %v901 = vxor.u32 %v775, 2147483648
        %v902 = vxor.u32 %v780, 2147483648
        %v903 = vxor.u32 %v783, 2147483648
        %v904 = vxor.u32 %v788, 2147483648
        %v905 = vxor.u32 %v791, 2147483648
        %v906 = vxor.u32 %v796, 2147483648
        %v907 = vxor.u32 %v799, 2147483648
        %v908 = vxor.u32 %v804, 2147483648
        %v909 = vxor.u32 %v807, 2147483648
        %v910 = vxor.u32 %v812, 2147483648
        %v911 = vxor.u32 %v815, 2147483648
        %v912 = vxor.u32 %v820, 2147483648
        %v913 = vxor.u32 %v823, 2147483648
        %v914 = vxor.u32 %v828, 2147483648
        %v915 = vxor.u32 %v831, 2147483648
        %v916 = vxor.u32 %v836, 2147483648
        %v917 = vxor.u32 %v839, 2147483648
        %v918 = vxor.u32 %v844, 2147483648
        %v919 = vxor.u32 %v847, 2147483648
        %v920 = vxor.u32 %v852, 2147483648
        %v921 = vxor.u32 %v855, 2147483648
        %v922 = vmul.f32 %v858, 1.442695
        %v923 = vpow.pop %v922
        %v924 = vmul.f32 %v859, 1.442695
        %v925 = vpow.pop %v924
        %v926 = vmul.f32 %v860, 1.442695
        %v927 = vpow.pop %v926
        %v928 = vmul.f32 %v861, 1.442695
        %v929 = vpow.pop %v928
        %v930 = vmul.f32 %v862, 1.442695
        %v931 = vpow.pop %v930
        %v932 = vmul.f32 %v863, 1.442695
        %v933 = vpow.pop %v932
        %v934 = vmul.f32 %v864, 1.442695
        %v935 = vpow.pop %v934
        %v936 = vmul.f32 %v865, 1.442695
        %v937 = vpow.pop %v936
        %v938 = vmul.f32 %v866, 1.442695
        %v939 = vpow.pop %v938
        %v940 = vmul.f32 %v867, 1.442695
        %v941 = vpow.pop %v940
        %v942 = vmul.f32 %v868, 1.442695
        %v943 = vpow.pop %v942
        %v944 = vmul.f32 %v869, 1.442695
        %v945 = vpow.pop %v944
        %v946 = vmul.f32 %v870, 1.442695
        %v947 = vpow.pop %v946
        %v948 = vmul.f32 %v871, 1.442695
        %v949 = vpow.pop %v948
        %v950 = vmul.f32 %v872, 1.442695
        %v951 = vpow.pop %v950
        %v952 = vmul.f32 %v873, 1.442695
        %v953 = vpow.pop %v952
        %v954 = vmul.f32 %v874, 1.442695
        %v955 = vpow.pop %v954
        %v956 = vmul.f32 %v875, 1.442695
        %v957 = vpow.pop %v956
        %v958 = vmul.f32 %v876, 1.442695
        %v959 = vpow.pop %v958
        %v960 = vmul.f32 %v877, 1.442695
        %v961 = vpow.pop %v960
        %v962 = vmul.f32 %v878, 1.442695
        %v963 = vpow.pop %v962
        %v964 = vmul.f32 %v879, 1.442695
        %v965 = vpow.pop %v964
        %v966 = vmul.f32 %v880, 1.442695
        %v967 = vpow.pop %v966
        %v968 = vmul.f32 %v881, 1.442695
        %v969 = vpow.pop %v968
        %v970 = vmul.f32 %v882, 1.442695
        %v971 = vpow.pop %v970
        %v972 = vmul.f32 %v883, 1.442695
        %v973 = vpow.pop %v972
        %v974 = vmul.f32 %v884, 1.442695
        %v975 = vpow.pop %v974
        %v976 = vmul.f32 %v885, 1.442695
        %v977 = vpow.pop %v976
        %v978 = vmul.f32 %v886, 1.442695
        %v979 = vpow.pop %v978
        %v980 = vmul.f32 %v887, 1.442695
        %v981 = vpow.pop %v980
        %v982 = vmul.f32 %v888, 1.442695
        %v983 = vpow.pop %v982
        %v984 = vmul.f32 %v889, 1.442695
        %v985 = vpow.pop %v984
        %v986 = vmul.f32 %v890, 1.442695
        %v987 = vpow.pop %v986
        %v988 = vmul.f32 %v891, 1.442695
        %v989 = vpow.pop %v988
        %v990 = vmul.f32 %v892, 1.442695
        %v991 = vpow.pop %v990
        %v992 = vmul.f32 %v893, 1.442695
        %v993 = vpow.pop %v992
        %v994 = vmul.f32 %v894, 1.442695
        %v995 = vpow.pop %v994
        %v996 = vmul.f32 %v895, 1.442695
        %v997 = vpow.pop %v996
        %v998 = vmul.f32 %v896, 1.442695
        %v999 = vpow.pop %v998
        %v1000 = vmul.f32 %v897, 1.442695
        %v1001 = vpow.pop %v1000
        %v1002 = vmul.f32 %v898, 1.442695
        %v1003 = vpow.pop %v1002
        %v1004 = vmul.f32 %v899, 1.442695
        %v1005 = vpow.pop %v1004
        %v1006 = vmul.f32 %v900, 1.442695
        %v1007 = vpow.pop %v1006
        %v1008 = vmul.f32 %v901, 1.442695
        %v1009 = vpow.pop %v1008
        %v1010 = vmul.f32 %v902, 1.442695
        %v1011 = vpow.pop %v1010
        %v1012 = vmul.f32 %v903, 1.442695
        %v1013 = vpow.pop %v1012
        %v1014 = vmul.f32 %v904, 1.442695
        %v1015 = vpow.pop %v1014
        %v1016 = vmul.f32 %v905, 1.442695
        %v1017 = vpow.pop %v1016
        %v1018 = vmul.f32 %v906, 1.442695
        %v1019 = vpow.pop %v1018
        %v1020 = vmul.f32 %v907, 1.442695
        %v1021 = vpow.pop %v1020
        %v1022 = vmul.f32 %v908, 1.442695
        %v1023 = vpow.pop %v1022
        %v1024 = vmul.f32 %v909, 1.442695
        %v1025 = vpow.pop %v1024
        %v1026 = vmul.f32 %v910, 1.442695
        %v1027 = vpow.pop %v1026
        %v1028 = vmul.f32 %v911, 1.442695
        %v1029 = vpow.pop %v1028
        %v1030 = vmul.f32 %v912, 1.442695
        %v1031 = vpow.pop %v1030
        %v1032 = vmul.f32 %v913, 1.442695
        %v1033 = vpow.pop %v1032
        %v1034 = vmul.f32 %v914, 1.442695
        %v1035 = vpow.pop %v1034
        %v1036 = vmul.f32 %v915, 1.442695
        %v1037 = vpow.pop %v1036
        %v1038 = vmul.f32 %v916, 1.442695
        %v1039 = vpow.pop %v1038
        %v1040 = vmul.f32 %v917, 1.442695
        %v1041 = vpow.pop %v1040
        %v1042 = vmul.f32 %v918, 1.442695
        %v1043 = vpow.pop %v1042
        %v1044 = vmul.f32 %v919, 1.442695
        %v1045 = vpow.pop %v1044
        %v1046 = vmul.f32 %v920, 1.442695
        %v1047 = vpow.pop %v1046
        %v1048 = vmul.f32 %v921, 1.442695
        %v1049 = vpow.pop %v1048
        %v1050 = vadd.f32 %v923, 1.0
        %v1051 = vadd.f32 %v925, 1.0
        %v1052 = vadd.f32 %v927, 1.0
        %v1053 = vadd.f32 %v929, 1.0
        %v1054 = vadd.f32 %v931, 1.0
        %v1055 = vadd.f32 %v933, 1.0
        %v1056 = vadd.f32 %v935, 1.0
        %v1057 = vadd.f32 %v937, 1.0
        %v1058 = vadd.f32 %v939, 1.0
        %v1059 = vadd.f32 %v941, 1.0
        %v1060 = vadd.f32 %v943, 1.0
        %v1061 = vadd.f32 %v945, 1.0
        %v1062 = vadd.f32 %v947, 1.0
        %v1063 = vadd.f32 %v949, 1.0
        %v1064 = vadd.f32 %v951, 1.0
        %v1065 = vadd.f32 %v953, 1.0
        %v1066 = vadd.f32 %v955, 1.0
        %v1067 = vadd.f32 %v957, 1.0
        %v1068 = vadd.f32 %v959, 1.0
        %v1069 = vadd.f32 %v961, 1.0
        %v1070 = vadd.f32 %v963, 1.0
        %v1071 = vadd.f32 %v965, 1.0
        %v1072 = vadd.f32 %v967, 1.0
        %v1073 = vadd.f32 %v969, 1.0
        %v1074 = vadd.f32 %v971, 1.0
        %v1075 = vadd.f32 %v973, 1.0
        %v1076 = vadd.f32 %v975, 1.0
        %v1077 = vadd.f32 %v977, 1.0
        %v1078 = vadd.f32 %v979, 1.0
        %v1079 = vadd.f32 %v981, 1.0
        %v1080 = vadd.f32 %v983, 1.0
        %v1081 = vadd.f32 %v985, 1.0
        %v1082 = vadd.f32 %v987, 1.0
        %v1083 = vadd.f32 %v989, 1.0
        %v1084 = vadd.f32 %v991, 1.0
        %v1085 = vadd.f32 %v993, 1.0
        %v1086 = vadd.f32 %v995, 1.0
        %v1087 = vadd.f32 %v997, 1.0
        %v1088 = vadd.f32 %v999, 1.0
        %v1089 = vadd.f32 %v1001, 1.0
        %v1090 = vadd.f32 %v1003, 1.0
        %v1091 = vadd.f32 %v1005, 1.0
        %v1092 = vadd.f32 %v1007, 1.0
        %v1093 = vadd.f32 %v1009, 1.0
        %v1094 = vadd.f32 %v1011, 1.0
        %v1095 = vadd.f32 %v1013, 1.0
        %v1096 = vadd.f32 %v1015, 1.0
        %v1097 = vadd.f32 %v1017, 1.0
        %v1098 = vadd.f32 %v1019, 1.0
        %v1099 = vadd.f32 %v1021, 1.0
        %v1100 = vadd.f32 %v1023, 1.0
        %v1101 = vadd.f32 %v1025, 1.0
        %v1102 = vadd.f32 %v1027, 1.0
        %v1103 = vadd.f32 %v1029, 1.0
        %v1104 = vadd.f32 %v1031, 1.0
        %v1105 = vadd.f32 %v1033, 1.0
        %v1106 = vadd.f32 %v1035, 1.0
        %v1107 = vadd.f32 %v1037, 1.0
        %v1108 = vadd.f32 %v1039, 1.0
        %v1109 = vadd.f32 %v1041, 1.0
        %v1110 = vadd.f32 %v1043, 1.0
        %v1111 = vadd.f32 %v1045, 1.0
        %v1112 = vadd.f32 %v1047, 1.0
        %v1113 = vadd.f32 %v1049, 1.0
        %v1114 = vrcp.pop %v1050
        %v1115 = vmul.f32 1.0, %v1114
        %v1116 = vrcp.pop %v1051
        %v1117 = vmul.f32 1.0, %v1116
        %v1118 = vrcp.pop %v1052
        %v1119 = vmul.f32 1.0, %v1118
        %v1120 = vrcp.pop %v1053
        %v1121 = vmul.f32 1.0, %v1120
        %v1122 = vrcp.pop %v1054
        %v1123 = vmul.f32 1.0, %v1122
        %v1124 = vrcp.pop %v1055
        %v1125 = vmul.f32 1.0, %v1124
        %v1126 = vrcp.pop %v1056
        %v1127 = vmul.f32 1.0, %v1126
        %v1128 = vrcp.pop %v1057
        %v1129 = vmul.f32 1.0, %v1128
        %v1130 = vrcp.pop %v1058
        %v1131 = vmul.f32 1.0, %v1130
        %v1132 = vrcp.pop %v1059
        %v1133 = vmul.f32 1.0, %v1132
        %v1134 = vrcp.pop %v1060
        %v1135 = vmul.f32 1.0, %v1134
        %v1136 = vrcp.pop %v1061
        %v1137 = vmul.f32 1.0, %v1136
        %v1138 = vrcp.pop %v1062
        %v1139 = vmul.f32 1.0, %v1138
        %v1140 = vrcp.pop %v1063
        %v1141 = vmul.f32 1.0, %v1140
        %v1142 = vrcp.pop %v1064
        %v1143 = vmul.f32 1.0, %v1142
        %v1144 = vrcp.pop %v1065
        %v1145 = vmul.f32 1.0, %v1144
        %v1146 = vrcp.pop %v1066
        %v1147 = vmul.f32 1.0, %v1146
        %v1148 = vrcp.pop %v1067
        %v1149 = vmul.f32 1.0, %v1148
        %v1150 = vrcp.pop %v1068
        %v1151 = vmul.f32 1.0, %v1150
        %v1152 = vrcp.pop %v1069
        %v1153 = vmul.f32 1.0, %v1152
        %v1154 = vrcp.pop %v1070
        %v1155 = vmul.f32 1.0, %v1154
        %v1156 = vrcp.pop %v1071
        %v1157 = vmul.f32 1.0, %v1156
        %v1158 = vrcp.pop %v1072
        %v1159 = vmul.f32 1.0, %v1158
        %v1160 = vrcp.pop %v1073
        %v1161 = vmul.f32 1.0, %v1160
        %v1162 = vrcp.pop %v1074
        %v1163 = vmul.f32 1.0, %v1162
        %v1164 = vrcp.pop %v1075
        %v1165 = vmul.f32 1.0, %v1164
        %v1166 = vrcp.pop %v1076
        %v1167 = vmul.f32 1.0, %v1166
        %v1168 = vrcp.pop %v1077
        %v1169 = vmul.f32 1.0, %v1168
        %v1170 = vrcp.pop %v1078
        %v1171 = vmul.f32 1.0, %v1170
        %v1172 = vrcp.pop %v1079
        %v1173 = vmul.f32 1.0, %v1172
        %v1174 = vrcp.pop %v1080
        %v1175 = vmul.f32 1.0, %v1174
        %v1176 = vrcp.pop %v1081
        %v1177 = vmul.f32 1.0, %v1176
        %v1178 = vrcp.pop %v1082
        %v1179 = vmul.f32 1.0, %v1178
        %v1180 = vrcp.pop %v1083
        %v1181 = vmul.f32 1.0, %v1180
        %v1182 = vrcp.pop %v1084
        %v1183 = vmul.f32 1.0, %v1182
        %v1184 = vrcp.pop %v1085
        %v1185 = vmul.f32 1.0, %v1184
        %v1186 = vrcp.pop %v1086
        %v1187 = vmul.f32 1.0, %v1186
        %v1188 = vrcp.pop %v1087
        %v1189 = vmul.f32 1.0, %v1188
        %v1190 = vrcp.pop %v1088
        %v1191 = vmul.f32 1.0, %v1190
        %v1192 = vrcp.pop %v1089
        %v1193 = vmul.f32 1.0, %v1192
        %v1194 = vrcp.pop %v1090
        %v1195 = vmul.f32 1.0, %v1194
        %v1196 = vrcp.pop %v1091
        %v1197 = vmul.f32 1.0, %v1196
        %v1198 = vrcp.pop %v1092
        %v1199 = vmul.f32 1.0, %v1198
        %v1200 = vrcp.pop %v1093
        %v1201 = vmul.f32 1.0, %v1200
        %v1202 = vrcp.pop %v1094
        %v1203 = vmul.f32 1.0, %v1202
        %v1204 = vrcp.pop %v1095
        %v1205 = vmul.f32 1.0, %v1204
        %v1206 = vrcp.pop %v1096
        %v1207 = vmul.f32 1.0, %v1206
        %v1208 = vrcp.pop %v1097
        %v1209 = vmul.f32 1.0, %v1208
        %v1210 = vrcp.pop %v1098
        %v1211 = vmul.f32 1.0, %v1210
        %v1212 = vrcp.pop %v1099
        %v1213 = vmul.f32 1.0, %v1212
        %v1214 = vrcp.pop %v1100
        %v1215 = vmul.f32 1.0, %v1214
        %v1216 = vrcp.pop %v1101
        %v1217 = vmul.f32 1.0, %v1216
        %v1218 = vrcp.pop %v1102
        %v1219 = vmul.f32 1.0, %v1218
        %v1220 = vrcp.pop %v1103
        %v1221 = vmul.f32 1.0, %v1220
        %v1222 = vrcp.pop %v1104
        %v1223 = vmul.f32 1.0, %v1222
        %v1224 = vrcp.pop %v1105
        %v1225 = vmul.f32 1.0, %v1224
        %v1226 = vrcp.pop %v1106
        %v1227 = vmul.f32 1.0, %v1226
        %v1228 = vrcp.pop %v1107
        %v1229 = vmul.f32 1.0, %v1228
        %v1230 = vrcp.pop %v1108
        %v1231 = vmul.f32 1.0, %v1230
        %v1232 = vrcp.pop %v1109
        %v1233 = vmul.f32 1.0, %v1232
        %v1234 = vrcp.pop %v1110
        %v1235 = vmul.f32 1.0, %v1234
        %v1236 = vrcp.pop %v1111
        %v1237 = vmul.f32 1.0, %v1236
        %v1238 = vrcp.pop %v1112
        %v1239 = vmul.f32 1.0, %v1238
        %v1240 = vrcp.pop %v1113
        %v1241 = vmul.f32 1.0, %v1240
        %v1242 = vmul.f32 %v604, %v1115
        %v1243 = vmul.f32 %v607, %v1117
        %v1244 = vmul.f32 %v612, %v1119
        %v1245 = vmul.f32 %v615, %v1121
        %v1246 = vmul.f32 %v620, %v1123
        %v1247 = vmul.f32 %v623, %v1125
        %v1248 = vmul.f32 %v628, %v1127
        %v1249 = vmul.f32 %v631, %v1129
        %v1250 = vmul.f32 %v636, %v1131
        %v1251 = vmul.f32 %v639, %v1133
        %v1252 = vmul.f32 %v644, %v1135
        %v1253 = vmul.f32 %v647, %v1137
        %v1254 = vmul.f32 %v652, %v1139
        %v1255 = vmul.f32 %v655, %v1141
        %v1256 = vmul.f32 %v660, %v1143
        %v1257 = vmul.f32 %v663, %v1145
        %v1258 = vmul.f32 %v668, %v1147
        %v1259 = vmul.f32 %v671, %v1149
        %v1260 = vmul.f32 %v676, %v1151
        %v1261 = vmul.f32 %v679, %v1153
        %v1262 = vmul.f32 %v684, %v1155
        %v1263 = vmul.f32 %v687, %v1157
        %v1264 = vmul.f32 %v692, %v1159
        %v1265 = vmul.f32 %v695, %v1161
        %v1266 = vmul.f32 %v700, %v1163
        %v1267 = vmul.f32 %v703, %v1165
        %v1268 = vmul.f32 %v708, %v1167
        %v1269 = vmul.f32 %v711, %v1169
        %v1270 = vmul.f32 %v716, %v1171
        %v1271 = vmul.f32 %v719, %v1173
        %v1272 = vmul.f32 %v724, %v1175
        %v1273 = vmul.f32 %v727, %v1177
        %v1274 = vmul.f32 %v732, %v1179
        %v1275 = vmul.f32 %v735, %v1181
        %v1276 = vmul.f32 %v740, %v1183
        %v1277 = vmul.f32 %v743, %v1185
        %v1278 = vmul.f32 %v748, %v1187
        %v1279 = vmul.f32 %v751, %v1189
        %v1280 = vmul.f32 %v756, %v1191
        %v1281 = vmul.f32 %v759, %v1193
        %v1282 = vmul.f32 %v764, %v1195
        %v1283 = vmul.f32 %v767, %v1197
        %v1284 = vmul.f32 %v772, %v1199
        %v1285 = vmul.f32 %v775, %v1201
        %v1286 = vmul.f32 %v780, %v1203
        %v1287 = vmul.f32 %v783, %v1205
        %v1288 = vmul.f32 %v788, %v1207
        %v1289 = vmul.f32 %v791, %v1209
        %v1290 = vmul.f32 %v796, %v1211
        %v1291 = vmul.f32 %v799, %v1213
        %v1292 = vmul.f32 %v804, %v1215
        %v1293 = vmul.f32 %v807, %v1217
        %v1294 = vmul.f32 %v812, %v1219
        %v1295 = vmul.f32 %v815, %v1221
        %v1296 = vmul.f32 %v820, %v1223
        %v1297 = vmul.f32 %v823, %v1225
        %v1298 = vmul.f32 %v828, %v1227
        %v1299 = vmul.f32 %v831, %v1229
        %v1300 = vmul.f32 %v836, %v1231
        %v1301 = vmul.f32 %v839, %v1233
        %v1302 = vmul.f32 %v844, %v1235
        %v1303 = vmul.f32 %v847, %v1237
        %v1304 = vmul.f32 %v852, %v1239
        %v1305 = vmul.f32 %v855, %v1241
        %v1306 = vpack.c.bf16 %v1243, %v1242
        %v1307 = vpack.c.bf16 %v1245, %v1244
        %v1308 = vpack.c.bf16 %v1247, %v1246
        %v1309 = vpack.c.bf16 %v1249, %v1248
        %v1310 = vpack.c.bf16 %v1251, %v1250
        %v1311 = vpack.c.bf16 %v1253, %v1252
        %v1312 = vpack.c.bf16 %v1255, %v1254
        %v1313 = vpack.c.bf16 %v1257, %v1256
        %v1314 = vpack.c.bf16 %v1259, %v1258
        %v1315 = vpack.c.bf16 %v1261, %v1260
        %v1316 = vpack.c.bf16 %v1263, %v1262
        %v1317 = vpack.c.bf16 %v1265, %v1264
        %v1318 = vpack.c.bf16 %v1267, %v1266
        %v1319 = vpack.c.bf16 %v1269, %v1268
        %v1320 = vpack.c.bf16 %v1271, %v1270
        %v1321 = vpack.c.bf16 %v1273, %v1272
        %v1322 = vpack.c.bf16 %v1275, %v1274
        %v1323 = vpack.c.bf16 %v1277, %v1276
        %v1324 = vpack.c.bf16 %v1279, %v1278
        %v1325 = vpack.c.bf16 %v1281, %v1280
        %v1326 = vpack.c.bf16 %v1283, %v1282
        %v1327 = vpack.c.bf16 %v1285, %v1284
        %v1328 = vpack.c.bf16 %v1287, %v1286
        %v1329 = vpack.c.bf16 %v1289, %v1288
        %v1330 = vpack.c.bf16 %v1291, %v1290
        %v1331 = vpack.c.bf16 %v1293, %v1292
        %v1332 = vpack.c.bf16 %v1295, %v1294
        %v1333 = vpack.c.bf16 %v1297, %v1296
        %v1334 = vpack.c.bf16 %v1299, %v1298
        %v1335 = vpack.c.bf16 %v1301, %v1300
        %v1336 = vpack.c.bf16 %v1303, %v1302
        %v1337 = vpack.c.bf16 %v1305, %v1304
        %v1370 = vunpack.c.l.b16 %v1306
        %v1371 = vunpack.c.h.b16 %v1306
        %v1372 = vunpack.c.l.b16 %v1307
        %v1373 = vunpack.c.h.b16 %v1307
        %v1374 = vunpack.c.l.b16 %v1308
        %v1375 = vunpack.c.h.b16 %v1308
        %v1376 = vunpack.c.l.b16 %v1309
        %v1377 = vunpack.c.h.b16 %v1309
        %v1378 = vunpack.c.l.b16 %v1310
        %v1379 = vunpack.c.h.b16 %v1310
        %v1380 = vunpack.c.l.b16 %v1311
        %v1381 = vunpack.c.h.b16 %v1311
        %v1382 = vunpack.c.l.b16 %v1312
        %v1383 = vunpack.c.h.b16 %v1312
        %v1384 = vunpack.c.l.b16 %v1313
        %v1385 = vunpack.c.h.b16 %v1313
        %v1386 = vunpack.c.l.b16 %v1314
        %v1387 = vunpack.c.h.b16 %v1314
        %v1388 = vunpack.c.l.b16 %v1315
        %v1389 = vunpack.c.h.b16 %v1315
        %v1390 = vunpack.c.l.b16 %v1316
        %v1391 = vunpack.c.h.b16 %v1316
        %v1392 = vunpack.c.l.b16 %v1317
        %v1393 = vunpack.c.h.b16 %v1317
        %v1394 = vunpack.c.l.b16 %v1318
        %v1395 = vunpack.c.h.b16 %v1318
        %v1396 = vunpack.c.l.b16 %v1319
        %v1397 = vunpack.c.h.b16 %v1319
        %v1398 = vunpack.c.l.b16 %v1320
        %v1399 = vunpack.c.h.b16 %v1320
        %v1400 = vunpack.c.l.b16 %v1321
        %v1401 = vunpack.c.h.b16 %v1321
        %v1402 = vunpack.c.l.b16 %v1322
        %v1403 = vunpack.c.h.b16 %v1322
        %v1404 = vunpack.c.l.b16 %v1323
        %v1405 = vunpack.c.h.b16 %v1323
        %v1406 = vunpack.c.l.b16 %v1324
        %v1407 = vunpack.c.h.b16 %v1324
        %v1408 = vunpack.c.l.b16 %v1325
        %v1409 = vunpack.c.h.b16 %v1325
        %v1410 = vunpack.c.l.b16 %v1326
        %v1411 = vunpack.c.h.b16 %v1326
        %v1412 = vunpack.c.l.b16 %v1327
        %v1413 = vunpack.c.h.b16 %v1327
        %v1414 = vunpack.c.l.b16 %v1328
        %v1415 = vunpack.c.h.b16 %v1328
        %v1416 = vunpack.c.l.b16 %v1329
        %v1417 = vunpack.c.h.b16 %v1329
        %v1418 = vunpack.c.l.b16 %v1330
        %v1419 = vunpack.c.h.b16 %v1330
        %v1420 = vunpack.c.l.b16 %v1331
        %v1421 = vunpack.c.h.b16 %v1331
        %v1422 = vunpack.c.l.b16 %v1332
        %v1423 = vunpack.c.h.b16 %v1332
        %v1424 = vunpack.c.l.b16 %v1333
        %v1425 = vunpack.c.h.b16 %v1333
        %v1426 = vunpack.c.l.b16 %v1334
        %v1427 = vunpack.c.h.b16 %v1334
        %v1428 = vunpack.c.l.b16 %v1335
        %v1429 = vunpack.c.h.b16 %v1335
        %v1430 = vunpack.c.l.b16 %v1336
        %v1431 = vunpack.c.h.b16 %v1336
        %v1432 = vunpack.c.l.b16 %v1337
        %v1433 = vunpack.c.h.b16 %v1337
        %v1434 = vpack.c.b16 %v1370, %v1370
        %v1435 = vpack.c.b16 %v1371, %v1371
        %v1436 = vpack.c.b16 %v1372, %v1372
        %v1437 = vpack.c.b16 %v1373, %v1373
        %v1438 = vpack.c.b16 %v1374, %v1374
        %v1439 = vpack.c.b16 %v1375, %v1375
        %v1440 = vpack.c.b16 %v1376, %v1376
        %v1441 = vpack.c.b16 %v1377, %v1377
        %v1442 = vpack.c.b16 %v1378, %v1378
        %v1443 = vpack.c.b16 %v1379, %v1379
        %v1444 = vpack.c.b16 %v1380, %v1380
        %v1445 = vpack.c.b16 %v1381, %v1381
        %v1446 = vpack.c.b16 %v1382, %v1382
        %v1447 = vpack.c.b16 %v1383, %v1383
        %v1448 = vpack.c.b16 %v1384, %v1384
        %v1449 = vpack.c.b16 %v1385, %v1385
        %v1450 = vpack.c.b16 %v1386, %v1386
        %v1451 = vpack.c.b16 %v1387, %v1387
        %v1452 = vpack.c.b16 %v1388, %v1388
        %v1453 = vpack.c.b16 %v1389, %v1389
        %v1454 = vpack.c.b16 %v1390, %v1390
        %v1455 = vpack.c.b16 %v1391, %v1391
        %v1456 = vpack.c.b16 %v1392, %v1392
        %v1457 = vpack.c.b16 %v1393, %v1393
        %v1458 = vpack.c.b16 %v1394, %v1394
        %v1459 = vpack.c.b16 %v1395, %v1395
        %v1460 = vpack.c.b16 %v1396, %v1396
        %v1461 = vpack.c.b16 %v1397, %v1397
        %v1462 = vpack.c.b16 %v1398, %v1398
        %v1463 = vpack.c.b16 %v1399, %v1399
        %v1464 = vpack.c.b16 %v1400, %v1400
        %v1465 = vpack.c.b16 %v1401, %v1401
        %v1466 = vpack.c.b16 %v1402, %v1402
        %v1467 = vpack.c.b16 %v1403, %v1403
        %v1468 = vpack.c.b16 %v1404, %v1404
        %v1469 = vpack.c.b16 %v1405, %v1405
        %v1470 = vpack.c.b16 %v1406, %v1406
        %v1471 = vpack.c.b16 %v1407, %v1407
        %v1472 = vpack.c.b16 %v1408, %v1408
        %v1473 = vpack.c.b16 %v1409, %v1409
        %v1474 = vpack.c.b16 %v1410, %v1410
        %v1475 = vpack.c.b16 %v1411, %v1411
        %v1476 = vpack.c.b16 %v1412, %v1412
        %v1477 = vpack.c.b16 %v1413, %v1413
        %v1478 = vpack.c.b16 %v1414, %v1414
        %v1479 = vpack.c.b16 %v1415, %v1415
        %v1480 = vpack.c.b16 %v1416, %v1416
        %v1481 = vpack.c.b16 %v1417, %v1417
        %v1482 = vpack.c.b16 %v1418, %v1418
        %v1483 = vpack.c.b16 %v1419, %v1419
        %v1484 = vpack.c.b16 %v1420, %v1420
        %v1485 = vpack.c.b16 %v1421, %v1421
        %v1486 = vpack.c.b16 %v1422, %v1422
        %v1487 = vpack.c.b16 %v1423, %v1423
        %v1488 = vpack.c.b16 %v1424, %v1424
        %v1489 = vpack.c.b16 %v1425, %v1425
        %v1490 = vpack.c.b16 %v1426, %v1426
        %v1491 = vpack.c.b16 %v1427, %v1427
        %v1492 = vpack.c.b16 %v1428, %v1428
        %v1493 = vpack.c.b16 %v1429, %v1429
        %v1494 = vpack.c.b16 %v1430, %v1430
        %v1495 = vpack.c.b16 %v1431, %v1431
        %v1496 = vpack.c.b16 %v1432, %v1432
        %v1497 = vpack.c.b16 %v1433, %v1433
        %1562 = vst [vmem:[%s235] sm:$0xf] %v1434
        %1563 = vst [vmem:[%s235 + $0x4] sm:$0xf] %v1435
        %1564 = vst [vmem:[%s235 + $0x8] sm:$0xf] %v1436
        %1565 = vst [vmem:[%s235 + $0xc] sm:$0xf] %v1437
        %1566 = vst [vmem:[%s235 + $0x10] sm:$0xf] %v1438
        %1567 = vst [vmem:[%s235 + $0x14] sm:$0xf] %v1439
        %1568 = vst [vmem:[%s235 + $0x18] sm:$0xf] %v1440
        %1569 = vst [vmem:[%s235 + $0x1c] sm:$0xf] %v1441
        %1570 = vst [vmem:[%s235 + $0x20] sm:$0xf] %v1442
        %1571 = vst [vmem:[%s235 + $0x24] sm:$0xf] %v1443
        %1572 = vst [vmem:[%s235 + $0x28] sm:$0xf] %v1444
        %1573 = vst [vmem:[%s235 + $0x2c] sm:$0xf] %v1445
        %1574 = vst [vmem:[%s235 + $0x30] sm:$0xf] %v1446
        %1575 = vst [vmem:[%s235 + $0x34] sm:$0xf] %v1447
        %1576 = vst [vmem:[%s235 + $0x38] sm:$0xf] %v1448
        %1577 = vst [vmem:[%s235 + $0x3c] sm:$0xf] %v1449
        %1578 = vst [vmem:[%s235 + $0x40] sm:$0xf] %v1450
        %1579 = vst [vmem:[%s235 + $0x44] sm:$0xf] %v1451
        %1580 = vst [vmem:[%s235 + $0x48] sm:$0xf] %v1452
        %1581 = vst [vmem:[%s235 + $0x4c] sm:$0xf] %v1453
        %1582 = vst [vmem:[%s235 + $0x50] sm:$0xf] %v1454
        %1583 = vst [vmem:[%s235 + $0x54] sm:$0xf] %v1455
        %1584 = vst [vmem:[%s235 + $0x58] sm:$0xf] %v1456
        %1585 = vst [vmem:[%s235 + $0x5c] sm:$0xf] %v1457
        %1586 = vst [vmem:[%s235 + $0x60] sm:$0xf] %v1458
        %1587 = vst [vmem:[%s235 + $0x64] sm:$0xf] %v1459
        %1588 = vst [vmem:[%s235 + $0x68] sm:$0xf] %v1460
        %1589 = vst [vmem:[%s235 + $0x6c] sm:$0xf] %v1461
        %1590 = vst [vmem:[%s235 + $0x70] sm:$0xf] %v1462
        %1591 = vst [vmem:[%s235 + $0x74] sm:$0xf] %v1463
        %1592 = vst [vmem:[%s235 + $0x78] sm:$0xf] %v1464
        %1593 = vst [vmem:[%s235 + $0x7c] sm:$0xf] %v1465
        %1594 = vst [vmem:[%s235 + $0x80] sm:$0xf] %v1466
        %1595 = vst [vmem:[%s235 + $0x84] sm:$0xf] %v1467
        %1596 = vst [vmem:[%s235 + $0x88] sm:$0xf] %v1468
        %1597 = vst [vmem:[%s235 + $0x8c] sm:$0xf] %v1469
        %1598 = vst [vmem:[%s235 + $0x90] sm:$0xf] %v1470
        %1599 = vst [vmem:[%s235 + $0x94] sm:$0xf] %v1471
        %1600 = vst [vmem:[%s235 + $0x98] sm:$0xf] %v1472
        %1601 = vst [vmem:[%s235 + $0x9c] sm:$0xf] %v1473
        %1602 = vst [vmem:[%s235 + $0xa0] sm:$0xf] %v1474
        %1603 = vst [vmem:[%s235 + $0xa4] sm:$0xf] %v1475
        %1604 = vst [vmem:[%s235 + $0xa8] sm:$0xf] %v1476
        %1605 = vst [vmem:[%s235 + $0xac] sm:$0xf] %v1477
        %1606 = vst [vmem:[%s235 + $0xb0] sm:$0xf] %v1478
        %1607 = vst [vmem:[%s235 + $0xb4] sm:$0xf] %v1479
        %1608 = vst [vmem:[%s235 + $0xb8] sm:$0xf] %v1480
        %1609 = vst [vmem:[%s235 + $0xbc] sm:$0xf] %v1481
        %1610 = vst [vmem:[%s235 + $0xc0] sm:$0xf] %v1482
        %1611 = vst [vmem:[%s235 + $0xc4] sm:$0xf] %v1483
        %1612 = vst [vmem:[%s235 + $0xc8] sm:$0xf] %v1484
        %1613 = vst [vmem:[%s235 + $0xcc] sm:$0xf] %v1485
        %1614 = vst [vmem:[%s235 + $0xd0] sm:$0xf] %v1486
        %1615 = vst [vmem:[%s235 + $0xd4] sm:$0xf] %v1487
        %1616 = vst [vmem:[%s235 + $0xd8] sm:$0xf] %v1488
        %1617 = vst [vmem:[%s235 + $0xdc] sm:$0xf] %v1489
        %1618 = vst [vmem:[%s235 + $0xe0] sm:$0xf] %v1490
        %1619 = vst [vmem:[%s235 + $0xe4] sm:$0xf] %v1491
        %1620 = vst [vmem:[%s235 + $0xe8] sm:$0xf] %v1492
        %1621 = vst [vmem:[%s235 + $0xec] sm:$0xf] %v1493
        %1622 = vst [vmem:[%s235 + $0xf0] sm:$0xf] %v1494
        %1623 = vst [vmem:[%s235 + $0xf4] sm:$0xf] %v1495
        %1624 = vst [vmem:[%s235 + $0xf8] sm:$0xf] %v1496
        %1625 = vst [vmem:[%s235 + $0xfc] sm:$0xf] %v1497
        %s1626 = sand.u32 %s121, 1
        %s1627 = scalar_lea.sflag [#allocation4], %s1626
        %s1628 = sand.u32 %s121, 1
        %s1629 = smul.addr %s1628, 256
        %s1630 = scalar_lea.vmem [#allocation7], %s1629
        // Predicated region
        $region41: #{tpu_custom_call.1} parent=31 // pred_check
          %p1631 = pneg %p131
        $region42: #{tpu_custom_call.1} parent=31 // pred_check_branch
          %1633 = sbr.rel (%p1631) target = $region44
        $region43: #{tpu_custom_call.1} parent=31 // pred_region
          %s1634 = smul.u32 64, %s25
          %s1636 = ssub.s32 4096, 4096
          %1637 = vsyncadd %s1627, %s1636
          %s1638 = sadd.s32 %s26, %s1634
          %s1639 = smul.addr %s1638, 64
          %s1640 = scalar_lea.hbm %s3, %s1639
          %s1641 = sshll.u32 %s1630, 4
          %s1642 = int_to_ptr.vmem [resolvable:$true] %s1641
          %1647 = dma.vmem_to_hbm [thread:$0]  %s1642, 4096, %s1640, %s1627, 64, 64, 4
        $region44: #{tpu_custom_call.1} parent=31 // pred_fallthru
          _
      $region32: #{tpu_custom_call.1} parent=5 // pred_fallthru
        _
      %p1648 = scmp.le.s32.totalorder 2, %s16
      // Predicated region
      $region45: #{tpu_custom_call.1} parent=5 // pred_check
        %p1649 = pneg %p1648
      $region46: #{tpu_custom_call.1} parent=5 // pred_check_branch
        %1651 = sbr.rel (%p1649) target = $region48
      $region47: #{tpu_custom_call.1} parent=5 // pred_region
        %s1652 = ssub.s32 %s16, 2
        // Predicated region
        $region49: #{tpu_custom_call.1} parent=47 // pred_check
          %p1653 = pneg %p137
        $region50: #{tpu_custom_call.1} parent=47 // pred_check_branch
          %1655 = sbr.rel (%p1653) target = $region52
        $region51: #{tpu_custom_call.1} parent=47 // pred_region
          %s1656 = sand.u32 %s122, 1
          %s1657 = scalar_lea.sflag [#allocation4], %s1656
          %s1658 = sand.u32 %s122, 1
          %s1659 = smul.addr %s1658, 256
          %s1660 = scalar_lea.vmem [#allocation7], %s1659
          %1661 = dma.done %s1657, 4096
        $region52: #{tpu_custom_call.1} parent=47 // pred_fallthru
          _
      $region48: #{tpu_custom_call.1} parent=5 // pred_fallthru
        _
    $region6: #{tpu_custom_call.1} parent=1 // loop_footer
      %s20 = sadd.s32 1, %s16
    $region7: #{tpu_custom_call.1} parent=1 // loop_footer_branch
      %15 = sbr.rel target = $region3
    $region8: #{tpu_custom_call.1} parent=1 // loop_exit
      _
    %1662 = vsyncpa [#allocation3], 1
    %s1663 = scalar_lea.sflag [#allocation3], 1
    %1664 = vsyncpa %s1663, 1
    %1665 = vsyncpa [#allocation6], 1
    %1666 = vsyncpa [#allocation4], 1
    %s1667 = scalar_lea.sflag [#allocation4], 1
    %1668 = vsyncpa %s1667, 1

</llo_original>
